<compile_context>
chip_gen: v6e
topology: v6e:2x2x1
jax: 0.10.0
libtpu: 0.0.40
codegen_flags: <defaults>
</compile_context>

<pallas_src>
import jax
import jax.numpy as jnp
from jax import lax
from jax.experimental import pallas as pl
from jax.experimental.pallas import tpu as pltpu

_UNROLL_T_MAX = 32   # full Python unroll of the time loop up to this length


def decoder_kernel(gx0_ref, wih_ref, whh_ref, b_ref, h0_ref, c0_ref,
                   fcw_ref, fcb_ref,
                   out_ref, hN_ref, cN_ref,
                   seq_ref, gx_ref):
    """Grid axis 0 = LSTM layer (sequential).

    seq_ref: (T*B, H)  persists across layers; carries this layer's output sequence
             (row t*B + b = hidden state at time t for batch b) = next layer's input.
    gx_ref : (T*B, 4H) precomputed input projection (+ bias) for the current layer,
             gate order i|f|g|o along the last (lane) axis.
    """
    l = pl.program_id(0)
    L = pl.num_programs(0)
    TB, H = seq_ref.shape
    B = h0_ref.shape[1]
    T = TB // B

    # ---- Input projection (+ combined bias) for ALL timesteps: one fused matmul per
    #      layer, off the serial h->h chain.  Layer 0's projection was hoisted to the
    #      wrapper (one big XLA matmul), so here it is just consumed.
    @pl.when(l == 0)
    def _():
        gx_ref[...] = gx0_ref[...]

    @pl.when(l != 0)
    def _():
        gx_ref[...] = (
            lax.dot_general(seq_ref[...], wih_ref[0],          # (T*B,H) x (H,4H)
                            (((1,), (0,)), ((), ())),
                            preferred_element_type=jnp.float32)
            + b_ref[0])                                        # (1, 4H) broadcast

    w_hh = whh_ref[0]                                          # (H, 4H), gates i|f|g|o

    h = h0_ref[0]                                              # (B, H)
    c = c0_ref[0]                                              # (B, H)

    def lstm_step(h, c, gx_rows):
        # ONE fused recurrent matmul per step: (B,H) x (H,4H) -> (B,4H).
        gates = gx_rows + jnp.dot(h, w_hh, preferred_element_type=jnp.float32)
        i_g = jax.nn.sigmoid(gates[:, 0 * H:1 * H])
        f_g = jax.nn.sigmoid(gates[:, 1 * H:2 * H])
        g_g = jnp.tanh(gates[:, 2 * H:3 * H])
        o_g = jax.nn.sigmoid(gates[:, 3 * H:4 * H])
        c = f_g * c + i_g * g_g
        h = o_g * jnp.tanh(c)
        return h, c

    if T <= _UNROLL_T_MAX:
        # Fully unrolled: static indices, scheduler can overlap MXU/EUP/VPU across steps.
        for t in range(T):
            r0 = t * B
            h, c = lstm_step(h, c, gx_ref[r0:r0 + B, :])
            seq_ref[r0:r0 + B, :] = h
    else:
        # Long sequences: bound live ranges / compile time with fori_loop + small unroll.
        def body(t, carry):
            h, c = carry
            r0 = pl.multiple_of(t * B, B)
            h, c = lstm_step(h, c, gx_ref[pl.ds(r0, B), :])
            seq_ref[pl.ds(r0, B), :] = h
            return (h, c)
        h, c = lax.fori_loop(0, T, body, (h, c), unroll=4)

    hN_ref[0] = h
    cN_ref[0] = c

    # ---- Epilogue (last layer only): ReLU + Linear, emitted as a lane-dense (O, T*B)
    #      slab (fc_w @ relu(seq)^T); (B, T, O) reshape/transpose is done in the wrapper.
    @pl.when(l == L - 1)
    def _():
        relu_seq = jnp.maximum(seq_ref[...], 0.0)              # (T*B, H)
        out_ref[...] = (
            lax.dot_general(fcw_ref[...], relu_seq,            # (O,H) x (T*B,H)^T
                            (((1,), (1,)), ((), ())),
                            preferred_element_type=jnp.float32)
            + fcb_ref[...])                                    # (O, 1) broadcast


def decoder_forward(x, hidden, cell, wih, whh, bias, fc_w, fc_b):
    """x: (B,T,H), hidden/cell: (L,B,H), wih/whh: (L,4H,H), bias: (L,4H) (= b_ih + b_hh),
       fc_w: (O,H), fc_b: (O,).  Returns (out (B,T,O), hidden (L,B,H), cell (L,B,H))."""
    B, T, H = x.shape
    L = wih.shape[0]
    O = fc_w.shape[0]
    f32 = jnp.float32

    # Sequence-major dense rows: row t*B + b = x[b, t, :]
    x_tb = jnp.transpose(x, (1, 0, 2)).reshape(T * B, H).astype(f32)

    # Pre-transposed, gate-concatenated weights: (L, H, 4H), columns in i|f|g|o order.
    wih_cat = jnp.transpose(wih, (0, 2, 1)).astype(f32)
    whh_cat = jnp.transpose(whh, (0, 2, 1)).astype(f32)
    bias_r = bias.reshape(L, 1, 4 * H).astype(f32)

    # Layer-0 input projection hoisted out of the kernel (one XLA matmul); x itself is
    # never made VMEM-resident inside the kernel.
    gx0 = x_tb @ wih_cat[0] + bias_r[0]                        # (T*B, 4H)

    fcw = fc_w.astype(f32)                                     # (O, H)
    fcb = fc_b.reshape(O, 1).astype(f32)                       # (O, 1)

    out_raw, hN, cN = pl.pallas_call(
        decoder_kernel,
        out_shape=(
            jax.ShapeDtypeStruct((O, T * B), f32),             # lane-dense output slab
            jax.ShapeDtypeStruct((L, B, H), f32),
            jax.ShapeDtypeStruct((L, B, H), f32),
        ),
        grid=(L,),
        in_specs=[
            pl.BlockSpec((T * B, 4 * H), lambda l: (0, 0)),    # gx0 (layer-0 gates)
            pl.BlockSpec((1, H, 4 * H), lambda l: (l, 0, 0)),  # W_ih^T (concat) per layer
            pl.BlockSpec((1, H, 4 * H), lambda l: (l, 0, 0)),  # W_hh^T (concat) per layer
            pl.BlockSpec((1, 1, 4 * H), lambda l: (l, 0, 0)),  # bias per layer
            pl.BlockSpec((1, B, H), lambda l: (l, 0, 0)),      # h0 per layer
            pl.BlockSpec((1, B, H), lambda l: (l, 0, 0)),      # c0 per layer
            pl.BlockSpec((O, H), lambda l: (0, 0)),            # fc weight
            pl.BlockSpec((O, 1), lambda l: (0, 0)),            # fc bias
        ],
        out_specs=(
            pl.BlockSpec((O, T * B), lambda l: (0, 0)),        # out (written last layer)
            pl.BlockSpec((1, B, H), lambda l: (l, 0, 0)),      # final hidden per layer
            pl.BlockSpec((1, B, H), lambda l: (l, 0, 0)),      # final cell per layer
        ),
        scratch_shapes=[
            pltpu.VMEM((T * B, H), f32),                       # layer output sequence
            pltpu.VMEM((T * B, 4 * H), f32),                   # fused gate projections
        ],
        compiler_params=pltpu.CompilerParams(
            dimension_semantics=("arbitrary",),                # layers are sequential
            vmem_limit_bytes=32 * 1024 * 1024),
    )(gx0, wih_cat, whh_cat, bias_r,
      hidden.astype(f32), cell.astype(f32), fcw, fcb)

    # (O, T*B) -> (B, T, O) in XLA (layout plumbing kept out of the kernel).
    out = jnp.transpose(out_raw.reshape(O, T, B), (2, 1, 0))
    return out, hN, cN


def reference_forward(x, hidden, cell, wih, whh, bias, fc_w, fc_b):
    """Pure-JAX reference matching PyTorch LSTM (gate order i,f,g,o) + ReLU + Linear."""
    B, T, H = x.shape
    L = wih.shape[0]
    seq = x
    hs, cs = [], []
    for l in range(L):
        h, c = hidden[l], cell[l]
        outs = []
        for t in range(T):
            g = seq[:, t, :] @ wih[l].T + h @ whh[l].T + bias[l]
            i = jax.nn.sigmoid(g[:, :H])
            f = jax.nn.sigmoid(g[:, H:2 * H])
            gg = jnp.tanh(g[:, 2 * H:3 * H])
            o = jax.nn.sigmoid(g[:, 3 * H:])
            c = f * c + i * gg
            h = o * jnp.tanh(c)
            outs.append(h)
        seq = jnp.stack(outs, axis=1)
        hs.append(h)
        cs.append(c)
    out = jnp.maximum(seq, 0.0) @ fc_w.T + fc_b
    return out, jnp.stack(hs), jnp.stack(cs)


if __name__ == "__main__":
    B, T, H, L, O = 2, 8, 32, 2, 1   # batch, seq, hidden_size, num_layers, output_size

    key = jax.random.PRNGKey(0)
    k_x, k_h, k_c, k_ih, k_hh, k_b, k_fc, k_fcb, k_fc2, k_fcb2 = jax.random.split(key, 10)

    # Inputs (shapes match Decoder.forward: x batch_first, hidden/cell (L,B,H)).
    x = jax.random.normal(k_x, (B, T, H), dtype=jnp.float32)
    hidden = jax.random.normal(k_h, (L, B, H), dtype=jnp.float32)
    cell = jax.random.normal(k_c, (L, B, H), dtype=jnp.float32)

    # Parameters in PyTorch layout: weight_ih xavier_uniform, weight_hh orthogonal,
    # fc xavier_uniform.  (init_weights zeroes the LSTM biases; a small random combined
    # bias is used here to exercise the bias path against the reference.)
    xav_ih = (6.0 / (H + 4 * H)) ** 0.5
    wih = jax.random.uniform(k_ih, (L, 4 * H, H), jnp.float32, -xav_ih, xav_ih)
    whh = jnp.stack([jnp.linalg.qr(jax.random.normal(k, (4 * H, H), jnp.float32))[0]
                     for k in jax.random.split(k_hh, L)], axis=0)      # (L, 4H, H)
    bias = 0.1 * jax.random.normal(k_b, (L, 4 * H), jnp.float32)       # b_ih + b_hh combined
    xav_fc = (6.0 / (H + O)) ** 0.5
    fc_w = jax.random.uniform(k_fc, (O, H), jnp.float32, -xav_fc, xav_fc)
    fc_b = jax.random.uniform(k_fcb, (O,), jnp.float32,
                              -1.0 / (H ** 0.5), 1.0 / (H ** 0.5))

    out, hN, cN = decoder_forward(x, hidden, cell, wih, whh, bias, fc_w, fc_b)
    jax.block_until_ready((out, hN, cN))

    # Correctness check vs pure-JAX reference (output_size == 1 path).
    ref_out, ref_h, ref_c = reference_forward(x, hidden, cell, wih, whh, bias, fc_w, fc_b)
    assert out.shape == (B, T, O) and hN.shape == (L, B, H) and cN.shape == (L, B, H)
    assert jnp.max(jnp.abs(out - ref_out)) < 1e-4
    assert jnp.max(jnp.abs(hN - ref_h)) < 1e-4
    assert jnp.max(jnp.abs(cN - ref_c)) < 1e-4

    # Also exercise the general output_size > 1 epilogue path.
    O2 = 4
    xav_fc2 = (6.0 / (H + O2)) ** 0.5
    fc_w2 = jax.random.uniform(k_fc2, (O2, H), jnp.float32, -xav_fc2, xav_fc2)
    fc_b2 = jax.random.uniform(k_fcb2, (O2,), jnp.float32,
                               -1.0 / (H ** 0.5), 1.0 / (H ** 0.5))
    out2, h2, c2 = decoder_forward(x, hidden, cell, wih, whh, bias, fc_w2, fc_b2)
    jax.block_until_ready((out2, h2, c2))
    ref_out2, ref_h2, ref_c2 = reference_forward(x, hidden, cell, wih, whh, bias,
                                                 fc_w2, fc_b2)
    assert out2.shape == (B, T, O2)
    assert jnp.max(jnp.abs(out2 - ref_out2)) < 1e-4
    assert jnp.max(jnp.abs(h2 - ref_h2)) < 1e-4
    assert jnp.max(jnp.abs(c2 - ref_c2)) < 1e-4

    print("KERNEL_OK")
</pallas_src>

<mosaic_0001>
module attributes {stable_mosaic.version = 11 : i64} {
  func.func @decoder_kernel(%arg0: i32, %arg1: memref<16x128xf32, #tpu.memory_space<vmem>>, %arg2: memref<1x32x128xf32, #tpu.memory_space<vmem>>, %arg3: memref<1x32x128xf32, #tpu.memory_space<vmem>>, %arg4: memref<1x1x128xf32, #tpu.memory_space<vmem>>, %arg5: memref<1x2x32xf32, #tpu.memory_space<vmem>>, %arg6: memref<1x2x32xf32, #tpu.memory_space<vmem>>, %arg7: memref<1x32xf32, #tpu.memory_space<vmem>>, %arg8: memref<1x1xf32, #tpu.memory_space<vmem>>, %arg9: memref<1x16xf32, #tpu.memory_space<vmem>>, %arg10: memref<1x2x32xf32, #tpu.memory_space<vmem>>, %arg11: memref<1x2x32xf32, #tpu.memory_space<vmem>>, %arg12: memref<16x32xf32, #tpu.memory_space<vmem>>, %arg13: memref<16x128xf32, #tpu.memory_space<vmem>>) attributes {dimension_semantics = [#tpu.dimension_semantics<arbitrary>], iteration_bounds = array<i64: 2>, scalar_prefetch = 0 : i64, scratch_operands = 2 : i64, tpu.core_type = #tpu.core_type<tc>, window_params = [{pipeline_mode = #tpu.pipeline_mode<synchronous>, transform_indices = @transform_0, window_bounds = array<i64: 16, 128>}, {transform_indices = @transform_1, window_bounds = array<i64: 1, 32, 128>}, {transform_indices = @transform_2, window_bounds = array<i64: 1, 32, 128>}, {transform_indices = @transform_3, window_bounds = array<i64: 1, 1, 128>}, {transform_indices = @transform_4, window_bounds = array<i64: 1, 2, 32>}, {transform_indices = @transform_5, window_bounds = array<i64: 1, 2, 32>}, {pipeline_mode = #tpu.pipeline_mode<synchronous>, transform_indices = @transform_6, window_bounds = array<i64: 1, 32>}, {pipeline_mode = #tpu.pipeline_mode<synchronous>, transform_indices = @transform_7, window_bounds = array<i64: 1, 1>}, {pipeline_mode = #tpu.pipeline_mode<synchronous>, transform_indices = @transform_8, window_bounds = array<i64: 1, 16>}, {transform_indices = @transform_9, window_bounds = array<i64: 1, 2, 32>}, {transform_indices = @transform_10, window_bounds = array<i64: 1, 2, 32>}]} {
    %c0_i32 = arith.constant 0 : i32
    %0 = arith.cmpi eq, %arg0, %c0_i32 : i32
    %1 = arith.extui %0 : i1 to i32
    %c0_i32_0 = arith.constant 0 : i32
    %2 = arith.cmpi ne, %1, %c0_i32_0 : i32
    scf.if %2 {
      %c0_74 = arith.constant 0 : index
      %c0_75 = arith.constant 0 : index
      %253 = vector.load %arg1[%c0_74, %c0_75] : memref<16x128xf32, #tpu.memory_space<vmem>>, vector<16x128xf32>
      %c0_76 = arith.constant 0 : index
      %c0_77 = arith.constant 0 : index
      %254 = vector.load %arg13[%c0_76, %c0_77] : memref<16x128xf32, #tpu.memory_space<vmem>>, vector<16x128xf32>
      tpu.vector_store %arg13[%c0_76, %c0_77], %253 {strides = array<i32>} : memref<16x128xf32, #tpu.memory_space<vmem>>, vector<16x128xf32>,
    } else {
    }
    %c0_i32_1 = arith.constant 0 : i32
    %3 = arith.cmpi ne, %arg0, %c0_i32_1 : i32
    %4 = arith.extui %3 : i1 to i32
    %c0_i32_2 = arith.constant 0 : i32
    %5 = arith.cmpi ne, %4, %c0_i32_2 : i32
    scf.if %5 {
      %c0_74 = arith.constant 0 : index
      %c0_75 = arith.constant 0 : index
      %253 = vector.load %arg12[%c0_74, %c0_75] : memref<16x32xf32, #tpu.memory_space<vmem>>, vector<16x32xf32>
      %c0_76 = arith.constant 0 : index
      %c0_77 = arith.constant 0 : index
      %c0_78 = arith.constant 0 : index
      %254 = vector.load %arg2[%c0_76, %c0_77, %c0_78] : memref<1x32x128xf32, #tpu.memory_space<vmem>>, vector<1x32x128xf32>
      %255 = vector.shape_cast %254 : vector<1x32x128xf32> to vector<32x128xf32>
      %cst_79 = arith.constant dense<0.000000e+00> : vector<16x128xf32>
      %256 = tpu.matmul %253, %255, %cst_79 {dimension_numbers = #tpu.dot_dimension_numbers<[1], [0], [0], [1], [0, 0, 1, 1], [], []>} : vector<16x32xf32>, vector<32x128xf32>, vector<16x128xf32> -> vector<16x128xf32>
      %c0_80 = arith.constant 0 : index
      %c0_81 = arith.constant 0 : index
      %c0_82 = arith.constant 0 : index
      %257 = vector.load %arg4[%c0_80, %c0_81, %c0_82] : memref<1x1x128xf32, #tpu.memory_space<vmem>>, vector<1x1x128xf32>
      %258 = vector.shape_cast %257 : vector<1x1x128xf32> to vector<1x128xf32>
      %259 = vector.broadcast %258 : vector<1x128xf32> to vector<16x128xf32>
      %260 = arith.addf %256, %259 : vector<16x128xf32>
      %c0_83 = arith.constant 0 : index
      %c0_84 = arith.constant 0 : index
      %261 = vector.load %arg13[%c0_83, %c0_84] : memref<16x128xf32, #tpu.memory_space<vmem>>, vector<16x128xf32>
      tpu.vector_store %arg13[%c0_83, %c0_84], %260 {strides = array<i32>} : memref<16x128xf32, #tpu.memory_space<vmem>>, vector<16x128xf32>,
    } else {
    }
    %c0 = arith.constant 0 : index
    %c0_3 = arith.constant 0 : index
    %c0_4 = arith.constant 0 : index
    %6 = vector.load %arg3[%c0, %c0_3, %c0_4] : memref<1x32x128xf32, #tpu.memory_space<vmem>>, vector<1x32x128xf32>
    %7 = vector.shape_cast %6 : vector<1x32x128xf32> to vector<32x128xf32>
    %c0_5 = arith.constant 0 : index
    %c0_6 = arith.constant 0 : index
    %c0_7 = arith.constant 0 : index
    %8 = vector.load %arg5[%c0_5, %c0_6, %c0_7] : memref<1x2x32xf32, #tpu.memory_space<vmem>>, vector<1x2x32xf32>
    %9 = vector.shape_cast %8 : vector<1x2x32xf32> to vector<2x32xf32>
    %c0_8 = arith.constant 0 : index
    %c0_9 = arith.constant 0 : index
    %c0_10 = arith.constant 0 : index
    %10 = vector.load %arg6[%c0_8, %c0_9, %c0_10] : memref<1x2x32xf32, #tpu.memory_space<vmem>>, vector<1x2x32xf32>
    %11 = vector.shape_cast %10 : vector<1x2x32xf32> to vector<2x32xf32>
    %c0_11 = arith.constant 0 : index
    %c0_12 = arith.constant 0 : index
    %12 = vector.load %arg13[%c0_11, %c0_12] : memref<16x128xf32, #tpu.memory_space<vmem>>, vector<2x128xf32>
    %cst = arith.constant dense<0.000000e+00> : vector<2x128xf32>
    %13 = tpu.matmul %9, %7, %cst {dimension_numbers = #tpu.dot_dimension_numbers<[1], [0], [0], [1], [0, 0, 1, 1], [], []>} : vector<2x32xf32>, vector<32x128xf32>, vector<2x128xf32> -> vector<2x128xf32>
    %14 = arith.addf %12, %13 : vector<2x128xf32>
    %15 = vector.extract_strided_slice %14 {offsets = [0, 0], sizes = [2, 32], strides = [1, 1]} : vector<2x128xf32> to vector<2x32xf32>
    %16 = arith.negf %15 : vector<2x32xf32>
    %17 = math.exp %16 : vector<2x32xf32>
    %cst_13 = arith.constant 1.000000e+00 : f32
    %18 = vector.broadcast %cst_13 : f32 to vector<2x32xf32>
    %19 = arith.addf %18, %17 : vector<2x32xf32>
    %20 = arith.divf %18, %19 : vector<2x32xf32>
    %21 = vector.extract_strided_slice %14 {offsets = [0, 32], sizes = [2, 32], strides = [1, 1]} : vector<2x128xf32> to vector<2x32xf32>
    %22 = arith.negf %21 : vector<2x32xf32>
    %23 = math.exp %22 : vector<2x32xf32>
    %cst_14 = arith.constant 1.000000e+00 : f32
    %24 = vector.broadcast %cst_14 : f32 to vector<2x32xf32>
    %25 = arith.addf %24, %23 : vector<2x32xf32>
    %26 = arith.divf %24, %25 : vector<2x32xf32>
    %27 = vector.extract_strided_slice %14 {offsets = [0, 64], sizes = [2, 32], strides = [1, 1]} : vector<2x128xf32> to vector<2x32xf32>
    %28 = math.tanh %27 : vector<2x32xf32>
    %29 = vector.extract_strided_slice %14 {offsets = [0, 96], sizes = [2, 32], strides = [1, 1]} : vector<2x128xf32> to vector<2x32xf32>
    %30 = arith.negf %29 : vector<2x32xf32>
    %31 = math.exp %30 : vector<2x32xf32>
    %cst_15 = arith.constant 1.000000e+00 : f32
    %32 = vector.broadcast %cst_15 : f32 to vector<2x32xf32>
    %33 = arith.addf %32, %31 : vector<2x32xf32>
    %34 = arith.divf %32, %33 : vector<2x32xf32>
    %35 = arith.mulf %26, %11 : vector<2x32xf32>
    %36 = arith.mulf %20, %28 : vector<2x32xf32>
    %37 = arith.addf %35, %36 : vector<2x32xf32>
    %38 = math.tanh %37 : vector<2x32xf32>
    %39 = arith.mulf %34, %38 : vector<2x32xf32>
    %c0_16 = arith.constant 0 : index
    %c0_17 = arith.constant 0 : index
    %40 = vector.load %arg12[%c0_16, %c0_17] : memref<16x32xf32, #tpu.memory_space<vmem>>, vector<2x32xf32>
    tpu.vector_store %arg12[%c0_16, %c0_17], %39 {strides = array<i32>} : memref<16x32xf32, #tpu.memory_space<vmem>>, vector<2x32xf32>,
    %c2 = arith.constant 2 : index
    %c0_18 = arith.constant 0 : index
    %41 = vector.load %arg13[%c2, %c0_18] : memref<16x128xf32, #tpu.memory_space<vmem>>, vector<2x128xf32>
    %cst_19 = arith.constant dense<0.000000e+00> : vector<2x128xf32>
    %42 = tpu.matmul %39, %7, %cst_19 {dimension_numbers = #tpu.dot_dimension_numbers<[1], [0], [0], [1], [0, 0, 1, 1], [], []>} : vector<2x32xf32>, vector<32x128xf32>, vector<2x128xf32> -> vector<2x128xf32>
    %43 = arith.addf %41, %42 : vector<2x128xf32>
    %44 = vector.extract_strided_slice %43 {offsets = [0, 0], sizes = [2, 32], strides = [1, 1]} : vector<2x128xf32> to vector<2x32xf32>
    %45 = arith.negf %44 : vector<2x32xf32>
    %46 = math.exp %45 : vector<2x32xf32>
    %cst_20 = arith.constant 1.000000e+00 : f32
    %47 = vector.broadcast %cst_20 : f32 to vector<2x32xf32>
    %48 = arith.addf %47, %46 : vector<2x32xf32>
    %49 = arith.divf %47, %48 : vector<2x32xf32>
    %50 = vector.extract_strided_slice %43 {offsets = [0, 32], sizes = [2, 32], strides = [1, 1]} : vector<2x128xf32> to vector<2x32xf32>
    %51 = arith.negf %50 : vector<2x32xf32>
    %52 = math.exp %51 : vector<2x32xf32>
    %cst_21 = arith.constant 1.000000e+00 : f32
    %53 = vector.broadcast %cst_21 : f32 to vector<2x32xf32>
    %54 = arith.addf %53, %52 : vector<2x32xf32>
    %55 = arith.divf %53, %54 : vector<2x32xf32>
    %56 = vector.extract_strided_slice %43 {offsets = [0, 64], sizes = [2, 32], strides = [1, 1]} : vector<2x128xf32> to vector<2x32xf32>
    %57 = math.tanh %56 : vector<2x32xf32>
    %58 = vector.extract_strided_slice %43 {offsets = [0, 96], sizes = [2, 32], strides = [1, 1]} : vector<2x128xf32> to vector<2x32xf32>
    %59 = arith.negf %58 : vector<2x32xf32>
    %60 = math.exp %59 : vector<2x32xf32>
    %cst_22 = arith.constant 1.000000e+00 : f32
    %61 = vector.broadcast %cst_22 : f32 to vector<2x32xf32>
    %62 = arith.addf %61, %60 : vector<2x32xf32>
    %63 = arith.divf %61, %62 : vector<2x32xf32>
    %64 = arith.mulf %55, %37 : vector<2x32xf32>
    %65 = arith.mulf %49, %57 : vector<2x32xf32>
    %66 = arith.addf %64, %65 : vector<2x32xf32>
    %67 = math.tanh %66 : vector<2x32xf32>
    %68 = arith.mulf %63, %67 : vector<2x32xf32>
    %c2_23 = arith.constant 2 : index
    %c0_24 = arith.constant 0 : index
    %69 = vector.load %arg12[%c2_23, %c0_24] : memref<16x32xf32, #tpu.memory_space<vmem>>, vector<2x32xf32>
    tpu.vector_store %arg12[%c2_23, %c0_24], %68 {strides = array<i32>} : memref<16x32xf32, #tpu.memory_space<vmem>>, vector<2x32xf32>,
    %c4 = arith.constant 4 : index
    %c0_25 = arith.constant 0 : index
    %70 = vector.load %arg13[%c4, %c0_25] : memref<16x128xf32, #tpu.memory_space<vmem>>, vector<2x128xf32>
    %cst_26 = arith.constant dense<0.000000e+00> : vector<2x128xf32>
    %71 = tpu.matmul %68, %7, %cst_26 {dimension_numbers = #tpu.dot_dimension_numbers<[1], [0], [0], [1], [0, 0, 1, 1], [], []>} : vector<2x32xf32>, vector<32x128xf32>, vector<2x128xf32> -> vector<2x128xf32>
    %72 = arith.addf %70, %71 : vector<2x128xf32>
    %73 = vector.extract_strided_slice %72 {offsets = [0, 0], sizes = [2, 32], strides = [1, 1]} : vector<2x128xf32> to vector<2x32xf32>
    %74 = arith.negf %73 : vector<2x32xf32>
    %75 = math.exp %74 : vector<2x32xf32>
    %cst_27 = arith.constant 1.000000e+00 : f32
    %76 = vector.broadcast %cst_27 : f32 to vector<2x32xf32>
    %77 = arith.addf %76, %75 : vector<2x32xf32>
    %78 = arith.divf %76, %77 : vector<2x32xf32>
    %79 = vector.extract_strided_slice %72 {offsets = [0, 32], sizes = [2, 32], strides = [1, 1]} : vector<2x128xf32> to vector<2x32xf32>
    %80 = arith.negf %79 : vector<2x32xf32>
    %81 = math.exp %80 : vector<2x32xf32>
    %cst_28 = arith.constant 1.000000e+00 : f32
    %82 = vector.broadcast %cst_28 : f32 to vector<2x32xf32>
    %83 = arith.addf %82, %81 : vector<2x32xf32>
    %84 = arith.divf %82, %83 : vector<2x32xf32>
    %85 = vector.extract_strided_slice %72 {offsets = [0, 64], sizes = [2, 32], strides = [1, 1]} : vector<2x128xf32> to vector<2x32xf32>
    %86 = math.tanh %85 : vector<2x32xf32>
    %87 = vector.extract_strided_slice %72 {offsets = [0, 96], sizes = [2, 32], strides = [1, 1]} : vector<2x128xf32> to vector<2x32xf32>
    %88 = arith.negf %87 : vector<2x32xf32>
    %89 = math.exp %88 : vector<2x32xf32>
    %cst_29 = arith.constant 1.000000e+00 : f32
    %90 = vector.broadcast %cst_29 : f32 to vector<2x32xf32>
    %91 = arith.addf %90, %89 : vector<2x32xf32>
    %92 = arith.divf %90, %91 : vector<2x32xf32>
    %93 = arith.mulf %84, %66 : vector<2x32xf32>
    %94 = arith.mulf %78, %86 : vector<2x32xf32>
    %95 = arith.addf %93, %94 : vector<2x32xf32>
    %96 = math.tanh %95 : vector<2x32xf32>
    %97 = arith.mulf %92, %96 : vector<2x32xf32>
    %c4_30 = arith.constant 4 : index
    %c0_31 = arith.constant 0 : index
    %98 = vector.load %arg12[%c4_30, %c0_31] : memref<16x32xf32, #tpu.memory_space<vmem>>, vector<2x32xf32>
    tpu.vector_store %arg12[%c4_30, %c0_31], %97 {strides = array<i32>} : memref<16x32xf32, #tpu.memory_space<vmem>>, vector<2x32xf32>,
    %c6 = arith.constant 6 : index
    %c0_32 = arith.constant 0 : index
    %99 = vector.load %arg13[%c6, %c0_32] : memref<16x128xf32, #tpu.memory_space<vmem>>, vector<2x128xf32>
    %cst_33 = arith.constant dense<0.000000e+00> : vector<2x128xf32>
    %100 = tpu.matmul %97, %7, %cst_33 {dimension_numbers = #tpu.dot_dimension_numbers<[1], [0], [0], [1], [0, 0, 1, 1], [], []>} : vector<2x32xf32>, vector<32x128xf32>, vector<2x128xf32> -> vector<2x128xf32>
    %101 = arith.addf %99, %100 : vector<2x128xf32>
    %102 = vector.extract_strided_slice %101 {offsets = [0, 0], sizes = [2, 32], strides = [1, 1]} : vector<2x128xf32> to vector<2x32xf32>
    %103 = arith.negf %102 : vector<2x32xf32>
    %104 = math.exp %103 : vector<2x32xf32>
    %cst_34 = arith.constant 1.000000e+00 : f32
    %105 = vector.broadcast %cst_34 : f32 to vector<2x32xf32>
    %106 = arith.addf %105, %104 : vector<2x32xf32>
    %107 = arith.divf %105, %106 : vector<2x32xf32>
    %108 = vector.extract_strided_slice %101 {offsets = [0, 32], sizes = [2, 32], strides = [1, 1]} : vector<2x128xf32> to vector<2x32xf32>
    %109 = arith.negf %108 : vector<2x32xf32>
    %110 = math.exp %109 : vector<2x32xf32>
    %cst_35 = arith.constant 1.000000e+00 : f32
    %111 = vector.broadcast %cst_35 : f32 to vector<2x32xf32>
    %112 = arith.addf %111, %110 : vector<2x32xf32>
    %113 = arith.divf %111, %112 : vector<2x32xf32>
    %114 = vector.extract_strided_slice %101 {offsets = [0, 64], sizes = [2, 32], strides = [1, 1]} : vector<2x128xf32> to vector<2x32xf32>
    %115 = math.tanh %114 : vector<2x32xf32>
    %116 = vector.extract_strided_slice %101 {offsets = [0, 96], sizes = [2, 32], strides = [1, 1]} : vector<2x128xf32> to vector<2x32xf32>
    %117 = arith.negf %116 : vector<2x32xf32>
    %118 = math.exp %117 : vector<2x32xf32>
    %cst_36 = arith.constant 1.000000e+00 : f32
    %119 = vector.broadcast %cst_36 : f32 to vector<2x32xf32>
    %120 = arith.addf %119, %118 : vector<2x32xf32>
    %121 = arith.divf %119, %120 : vector<2x32xf32>
    %122 = arith.mulf %113, %95 : vector<2x32xf32>
    %123 = arith.mulf %107, %115 : vector<2x32xf32>
    %124 = arith.addf %122, %123 : vector<2x32xf32>
    %125 = math.tanh %124 : vector<2x32xf32>
    %126 = arith.mulf %121, %125 : vector<2x32xf32>
    %c6_37 = arith.constant 6 : index
    %c0_38 = arith.constant 0 : index
    %127 = vector.load %arg12[%c6_37, %c0_38] : memref<16x32xf32, #tpu.memory_space<vmem>>, vector<2x32xf32>
    tpu.vector_store %arg12[%c6_37, %c0_38], %126 {strides = array<i32>} : memref<16x32xf32, #tpu.memory_space<vmem>>, vector<2x32xf32>,
    %c8 = arith.constant 8 : index
    %c0_39 = arith.constant 0 : index
    %128 = vector.load %arg13[%c8, %c0_39] : memref<16x128xf32, #tpu.memory_space<vmem>>, vector<2x128xf32>
    %cst_40 = arith.constant dense<0.000000e+00> : vector<2x128xf32>
    %129 = tpu.matmul %126, %7, %cst_40 {dimension_numbers = #tpu.dot_dimension_numbers<[1], [0], [0], [1], [0, 0, 1, 1], [], []>} : vector<2x32xf32>, vector<32x128xf32>, vector<2x128xf32> -> vector<2x128xf32>
    %130 = arith.addf %128, %129 : vector<2x128xf32>
    %131 = vector.extract_strided_slice %130 {offsets = [0, 0], sizes = [2, 32], strides = [1, 1]} : vector<2x128xf32> to vector<2x32xf32>
    %132 = arith.negf %131 : vector<2x32xf32>
    %133 = math.exp %132 : vector<2x32xf32>
    %cst_41 = arith.constant 1.000000e+00 : f32
    %134 = vector.broadcast %cst_41 : f32 to vector<2x32xf32>
    %135 = arith.addf %134, %133 : vector<2x32xf32>
    %136 = arith.divf %134, %135 : vector<2x32xf32>
    %137 = vector.extract_strided_slice %130 {offsets = [0, 32], sizes = [2, 32], strides = [1, 1]} : vector<2x128xf32> to vector<2x32xf32>
    %138 = arith.negf %137 : vector<2x32xf32>
    %139 = math.exp %138 : vector<2x32xf32>
    %cst_42 = arith.constant 1.000000e+00 : f32
    %140 = vector.broadcast %cst_42 : f32 to vector<2x32xf32>
    %141 = arith.addf %140, %139 : vector<2x32xf32>
    %142 = arith.divf %140, %141 : vector<2x32xf32>
    %143 = vector.extract_strided_slice %130 {offsets = [0, 64], sizes = [2, 32], strides = [1, 1]} : vector<2x128xf32> to vector<2x32xf32>
    %144 = math.tanh %143 : vector<2x32xf32>
    %145 = vector.extract_strided_slice %130 {offsets = [0, 96], sizes = [2, 32], strides = [1, 1]} : vector<2x128xf32> to vector<2x32xf32>
    %146 = arith.negf %145 : vector<2x32xf32>
    %147 = math.exp %146 : vector<2x32xf32>
    %cst_43 = arith.constant 1.000000e+00 : f32
    %148 = vector.broadcast %cst_43 : f32 to vector<2x32xf32>
    %149 = arith.addf %148, %147 : vector<2x32xf32>
    %150 = arith.divf %148, %149 : vector<2x32xf32>
    %151 = arith.mulf %142, %124 : vector<2x32xf32>
    %152 = arith.mulf %136, %144 : vector<2x32xf32>
    %153 = arith.addf %151, %152 : vector<2x32xf32>
    %154 = math.tanh %153 : vector<2x32xf32>
    %155 = arith.mulf %150, %154 : vector<2x32xf32>
    %c8_44 = arith.constant 8 : index
    %c0_45 = arith.constant 0 : index
    %156 = vector.load %arg12[%c8_44, %c0_45] : memref<16x32xf32, #tpu.memory_space<vmem>>, vector<2x32xf32>
    tpu.vector_store %arg12[%c8_44, %c0_45], %155 {strides = array<i32>} : memref<16x32xf32, #tpu.memory_space<vmem>>, vector<2x32xf32>,
    %c10 = arith.constant 10 : index
    %c0_46 = arith.constant 0 : index
    %157 = vector.load %arg13[%c10, %c0_46] : memref<16x128xf32, #tpu.memory_space<vmem>>, vector<2x128xf32>
    %cst_47 = arith.constant dense<0.000000e+00> : vector<2x128xf32>
    %158 = tpu.matmul %155, %7, %cst_47 {dimension_numbers = #tpu.dot_dimension_numbers<[1], [0], [0], [1], [0, 0, 1, 1], [], []>} : vector<2x32xf32>, vector<32x128xf32>, vector<2x128xf32> -> vector<2x128xf32>
    %159 = arith.addf %157, %158 : vector<2x128xf32>
    %160 = vector.extract_strided_slice %159 {offsets = [0, 0], sizes = [2, 32], strides = [1, 1]} : vector<2x128xf32> to vector<2x32xf32>
    %161 = arith.negf %160 : vector<2x32xf32>
    %162 = math.exp %161 : vector<2x32xf32>
    %cst_48 = arith.constant 1.000000e+00 : f32
    %163 = vector.broadcast %cst_48 : f32 to vector<2x32xf32>
    %164 = arith.addf %163, %162 : vector<2x32xf32>
    %165 = arith.divf %163, %164 : vector<2x32xf32>
    %166 = vector.extract_strided_slice %159 {offsets = [0, 32], sizes = [2, 32], strides = [1, 1]} : vector<2x128xf32> to vector<2x32xf32>
    %167 = arith.negf %166 : vector<2x32xf32>
    %168 = math.exp %167 : vector<2x32xf32>
    %cst_49 = arith.constant 1.000000e+00 : f32
    %169 = vector.broadcast %cst_49 : f32 to vector<2x32xf32>
    %170 = arith.addf %169, %168 : vector<2x32xf32>
    %171 = arith.divf %169, %170 : vector<2x32xf32>
    %172 = vector.extract_strided_slice %159 {offsets = [0, 64], sizes = [2, 32], strides = [1, 1]} : vector<2x128xf32> to vector<2x32xf32>
    %173 = math.tanh %172 : vector<2x32xf32>
    %174 = vector.extract_strided_slice %159 {offsets = [0, 96], sizes = [2, 32], strides = [1, 1]} : vector<2x128xf32> to vector<2x32xf32>
    %175 = arith.negf %174 : vector<2x32xf32>
    %176 = math.exp %175 : vector<2x32xf32>
    %cst_50 = arith.constant 1.000000e+00 : f32
    %177 = vector.broadcast %cst_50 : f32 to vector<2x32xf32>
    %178 = arith.addf %177, %176 : vector<2x32xf32>
    %179 = arith.divf %177, %178 : vector<2x32xf32>
    %180 = arith.mulf %171, %153 : vector<2x32xf32>
    %181 = arith.mulf %165, %173 : vector<2x32xf32>
    %182 = arith.addf %180, %181 : vector<2x32xf32>
    %183 = math.tanh %182 : vector<2x32xf32>
    %184 = arith.mulf %179, %183 : vector<2x32xf32>
    %c10_51 = arith.constant 10 : index
    %c0_52 = arith.constant 0 : index
    %185 = vector.load %arg12[%c10_51, %c0_52] : memref<16x32xf32, #tpu.memory_space<vmem>>, vector<2x32xf32>
    tpu.vector_store %arg12[%c10_51, %c0_52], %184 {strides = array<i32>} : memref<16x32xf32, #tpu.memory_space<vmem>>, vector<2x32xf32>,
    %c12 = arith.constant 12 : index
    %c0_53 = arith.constant 0 : index
    %186 = vector.load %arg13[%c12, %c0_53] : memref<16x128xf32, #tpu.memory_space<vmem>>, vector<2x128xf32>
    %cst_54 = arith.constant dense<0.000000e+00> : vector<2x128xf32>
    %187 = tpu.matmul %184, %7, %cst_54 {dimension_numbers = #tpu.dot_dimension_numbers<[1], [0], [0], [1], [0, 0, 1, 1], [], []>} : vector<2x32xf32>, vector<32x128xf32>, vector<2x128xf32> -> vector<2x128xf32>
    %188 = arith.addf %186, %187 : vector<2x128xf32>
    %189 = vector.extract_strided_slice %188 {offsets = [0, 0], sizes = [2, 32], strides = [1, 1]} : vector<2x128xf32> to vector<2x32xf32>
    %190 = arith.negf %189 : vector<2x32xf32>
    %191 = math.exp %190 : vector<2x32xf32>
    %cst_55 = arith.constant 1.000000e+00 : f32
    %192 = vector.broadcast %cst_55 : f32 to vector<2x32xf32>
    %193 = arith.addf %192, %191 : vector<2x32xf32>
    %194 = arith.divf %192, %193 : vector<2x32xf32>
    %195 = vector.extract_strided_slice %188 {offsets = [0, 32], sizes = [2, 32], strides = [1, 1]} : vector<2x128xf32> to vector<2x32xf32>
    %196 = arith.negf %195 : vector<2x32xf32>
    %197 = math.exp %196 : vector<2x32xf32>
    %cst_56 = arith.constant 1.000000e+00 : f32
    %198 = vector.broadcast %cst_56 : f32 to vector<2x32xf32>
    %199 = arith.addf %198, %197 : vector<2x32xf32>
    %200 = arith.divf %198, %199 : vector<2x32xf32>
    %201 = vector.extract_strided_slice %188 {offsets = [0, 64], sizes = [2, 32], strides = [1, 1]} : vector<2x128xf32> to vector<2x32xf32>
    %202 = math.tanh %201 : vector<2x32xf32>
    %203 = vector.extract_strided_slice %188 {offsets = [0, 96], sizes = [2, 32], strides = [1, 1]} : vector<2x128xf32> to vector<2x32xf32>
    %204 = arith.negf %203 : vector<2x32xf32>
    %205 = math.exp %204 : vector<2x32xf32>
    %cst_57 = arith.constant 1.000000e+00 : f32
    %206 = vector.broadcast %cst_57 : f32 to vector<2x32xf32>
    %207 = arith.addf %206, %205 : vector<2x32xf32>
    %208 = arith.divf %206, %207 : vector<2x32xf32>
    %209 = arith.mulf %200, %182 : vector<2x32xf32>
    %210 = arith.mulf %194, %202 : vector<2x32xf32>
    %211 = arith.addf %209, %210 : vector<2x32xf32>
    %212 = math.tanh %211 : vector<2x32xf32>
    %213 = arith.mulf %208, %212 : vector<2x32xf32>
    %c12_58 = arith.constant 12 : index
    %c0_59 = arith.constant 0 : index
    %214 = vector.load %arg12[%c12_58, %c0_59] : memref<16x32xf32, #tpu.memory_space<vmem>>, vector<2x32xf32>
    tpu.vector_store %arg12[%c12_58, %c0_59], %213 {strides = array<i32>} : memref<16x32xf32, #tpu.memory_space<vmem>>, vector<2x32xf32>,
    %c14 = arith.constant 14 : index
    %c0_60 = arith.constant 0 : index
    %215 = vector.load %arg13[%c14, %c0_60] : memref<16x128xf32, #tpu.memory_space<vmem>>, vector<2x128xf32>
    %cst_61 = arith.constant dense<0.000000e+00> : vector<2x128xf32>
    %216 = tpu.matmul %213, %7, %cst_61 {dimension_numbers = #tpu.dot_dimension_numbers<[1], [0], [0], [1], [0, 0, 1, 1], [], []>} : vector<2x32xf32>, vector<32x128xf32>, vector<2x128xf32> -> vector<2x128xf32>
    %217 = arith.addf %215, %216 : vector<2x128xf32>
    %218 = vector.extract_strided_slice %217 {offsets = [0, 0], sizes = [2, 32], strides = [1, 1]} : vector<2x128xf32> to vector<2x32xf32>
    %219 = arith.negf %218 : vector<2x32xf32>
    %220 = math.exp %219 : vector<2x32xf32>
    %cst_62 = arith.constant 1.000000e+00 : f32
    %221 = vector.broadcast %cst_62 : f32 to vector<2x32xf32>
    %222 = arith.addf %221, %220 : vector<2x32xf32>
    %223 = arith.divf %221, %222 : vector<2x32xf32>
    %224 = vector.extract_strided_slice %217 {offsets = [0, 32], sizes = [2, 32], strides = [1, 1]} : vector<2x128xf32> to vector<2x32xf32>
    %225 = arith.negf %224 : vector<2x32xf32>
    %226 = math.exp %225 : vector<2x32xf32>
    %cst_63 = arith.constant 1.000000e+00 : f32
    %227 = vector.broadcast %cst_63 : f32 to vector<2x32xf32>
    %228 = arith.addf %227, %226 : vector<2x32xf32>
    %229 = arith.divf %227, %228 : vector<2x32xf32>
    %230 = vector.extract_strided_slice %217 {offsets = [0, 64], sizes = [2, 32], strides = [1, 1]} : vector<2x128xf32> to vector<2x32xf32>
    %231 = math.tanh %230 : vector<2x32xf32>
    %232 = vector.extract_strided_slice %217 {offsets = [0, 96], sizes = [2, 32], strides = [1, 1]} : vector<2x128xf32> to vector<2x32xf32>
    %233 = arith.negf %232 : vector<2x32xf32>
    %234 = math.exp %233 : vector<2x32xf32>
    %cst_64 = arith.constant 1.000000e+00 : f32
    %235 = vector.broadcast %cst_64 : f32 to vector<2x32xf32>
    %236 = arith.addf %235, %234 : vector<2x32xf32>
    %237 = arith.divf %235, %236 : vector<2x32xf32>
    %238 = arith.mulf %229, %211 : vector<2x32xf32>
    %239 = arith.mulf %223, %231 : vector<2x32xf32>
    %240 = arith.addf %238, %239 : vector<2x32xf32>
    %241 = math.tanh %240 : vector<2x32xf32>
    %242 = arith.mulf %237, %241 : vector<2x32xf32>
    %c14_65 = arith.constant 14 : index
    %c0_66 = arith.constant 0 : index
    %243 = vector.load %arg12[%c14_65, %c0_66] : memref<16x32xf32, #tpu.memory_space<vmem>>, vector<2x32xf32>
    tpu.vector_store %arg12[%c14_65, %c0_66], %242 {strides = array<i32>} : memref<16x32xf32, #tpu.memory_space<vmem>>, vector<2x32xf32>,
    %c0_67 = arith.constant 0 : index
    %c0_68 = arith.constant 0 : index
    %c0_69 = arith.constant 0 : index
    %244 = vector.load %arg10[%c0_67, %c0_68, %c0_69] : memref<1x2x32xf32, #tpu.memory_space<vmem>>, vector<1x2x32xf32>
    %245 = vector.shape_cast %244 : vector<1x2x32xf32> to vector<2x32xf32>
    %246 = vector.shape_cast %242 : vector<2x32xf32> to vector<1x2x32xf32>
    tpu.vector_store %arg10[%c0_67, %c0_68, %c0_69], %246 {strides = array<i32>} : memref<1x2x32xf32, #tpu.memory_space<vmem>>, vector<1x2x32xf32>,
    %c0_70 = arith.constant 0 : index
    %c0_71 = arith.constant 0 : index
    %c0_72 = arith.constant 0 : index
    %247 = vector.load %arg11[%c0_70, %c0_71, %c0_72] : memref<1x2x32xf32, #tpu.memory_space<vmem>>, vector<1x2x32xf32>
    %248 = vector.shape_cast %247 : vector<1x2x32xf32> to vector<2x32xf32>
    %249 = vector.shape_cast %240 : vector<2x32xf32> to vector<1x2x32xf32>
    tpu.vector_store %arg11[%c0_70, %c0_71, %c0_72], %249 {strides = array<i32>} : memref<1x2x32xf32, #tpu.memory_space<vmem>>, vector<1x2x32xf32>,
    %c1_i32 = arith.constant 1 : i32
    %250 = arith.cmpi eq, %arg0, %c1_i32 : i32
    %251 = arith.extui %250 : i1 to i32
    %c0_i32_73 = arith.constant 0 : i32
    %252 = arith.cmpi ne, %251, %c0_i32_73 : i32
    scf.if %252 {
      %c0_74 = arith.constant 0 : index
      %c0_75 = arith.constant 0 : index
      %253 = vector.load %arg12[%c0_74, %c0_75] : memref<16x32xf32, #tpu.memory_space<vmem>>, vector<16x32xf32>
      %cst_76 = arith.constant 0.000000e+00 : f32
      %254 = vector.broadcast %cst_76 : f32 to vector<16x32xf32>
      %255 = arith.maximumf %253, %254 : vector<16x32xf32>
      %c0_77 = arith.constant 0 : index
      %c0_78 = arith.constant 0 : index
      %256 = vector.load %arg7[%c0_77, %c0_78] : memref<1x32xf32, #tpu.memory_space<vmem>>, vector<1x32xf32>
      %cst_79 = arith.constant dense<0.000000e+00> : vector<1x16xf32>
      %257 = tpu.matmul %256, %255, %cst_79 {dimension_numbers = #tpu.dot_dimension_numbers<[1], [1], [0], [0], [0, 0, 1, 0], [], []>} : vector<1x32xf32>, vector<16x32xf32>, vector<1x16xf32> -> vector<1x16xf32>
      %c0_80 = arith.constant 0 : index
      %c0_81 = arith.constant 0 : index
      %258 = vector.load %arg8[%c0_80, %c0_81] : memref<1x1xf32, #tpu.memory_space<vmem>>, vector<1x1xf32>
      %259 = vector.broadcast %258 : vector<1x1xf32> to vector<1x16xf32>
      %260 = arith.addf %257, %259 : vector<1x16xf32>
      %c0_82 = arith.constant 0 : index
      %c0_83 = arith.constant 0 : index
      %261 = vector.load %arg9[%c0_82, %c0_83] : memref<1x16xf32, #tpu.memory_space<vmem>>, vector<1x16xf32>
      tpu.vector_store %arg9[%c0_82, %c0_83], %260 {strides = array<i32>} : memref<1x16xf32, #tpu.memory_space<vmem>>, vector<1x16xf32>,
    } else {
    }
    return
  }
  func.func @transform_0(%arg0: i32) -> (i32, i32) {
    %c0_i32 = arith.constant 0 : i32
    %c0_i32_0 = arith.constant 0 : i32
    %c0_i32_1 = arith.constant 0 : i32
    return %c0_i32, %c0_i32_0 : i32, i32
  }
  func.func @transform_1(%arg0: i32) -> (i32, i32, i32) {
    %c0_i32 = arith.constant 0 : i32
    %c0_i32_0 = arith.constant 0 : i32
    %c0_i32_1 = arith.constant 0 : i32
    return %arg0, %c0_i32, %c0_i32_0 : i32, i32, i32
  }
  func.func @transform_2(%arg0: i32) -> (i32, i32, i32) {
    %c0_i32 = arith.constant 0 : i32
    %c0_i32_0 = arith.constant 0 : i32
    %c0_i32_1 = arith.constant 0 : i32
    return %arg0, %c0_i32, %c0_i32_0 : i32, i32, i32
  }
  func.func @transform_3(%arg0: i32) -> (i32, i32, i32) {
    %c0_i32 = arith.constant 0 : i32
    %c0_i32_0 = arith.constant 0 : i32
    %c0_i32_1 = arith.constant 0 : i32
    return %arg0, %c0_i32, %c0_i32_0 : i32, i32, i32
  }
  func.func @transform_4(%arg0: i32) -> (i32, i32, i32) {
    %c0_i32 = arith.constant 0 : i32
    %c0_i32_0 = arith.constant 0 : i32
    %c0_i32_1 = arith.constant 0 : i32
    return %arg0, %c0_i32, %c0_i32_0 : i32, i32, i32
  }
  func.func @transform_5(%arg0: i32) -> (i32, i32, i32) {
    %c0_i32 = arith.constant 0 : i32
    %c0_i32_0 = arith.constant 0 : i32
    %c0_i32_1 = arith.constant 0 : i32
    return %arg0, %c0_i32, %c0_i32_0 : i32, i32, i32
  }
  func.func @transform_6(%arg0: i32) -> (i32, i32) {
    %c0_i32 = arith.constant 0 : i32
    %c0_i32_0 = arith.constant 0 : i32
    %c0_i32_1 = arith.constant 0 : i32
    return %c0_i32, %c0_i32_0 : i32, i32
  }
  func.func @transform_7(%arg0: i32) -> (i32, i32) {
    %c0_i32 = arith.constant 0 : i32
    %c0_i32_0 = arith.constant 0 : i32
    %c0_i32_1 = arith.constant 0 : i32
    return %c0_i32, %c0_i32_0 : i32, i32
  }
  func.func @transform_8(%arg0: i32) -> (i32, i32) {
    %c0_i32 = arith.constant 0 : i32
    %c0_i32_0 = arith.constant 0 : i32
    %c0_i32_1 = arith.constant 0 : i32
    return %c0_i32, %c0_i32_0 : i32, i32
  }
  func.func @transform_9(%arg0: i32) -> (i32, i32, i32) {
    %c0_i32 = arith.constant 0 : i32
    %c0_i32_0 = arith.constant 0 : i32
    %c0_i32_1 = arith.constant 0 : i32
    return %arg0, %c0_i32, %c0_i32_0 : i32, i32, i32
  }
  func.func @transform_10(%arg0: i32) -> (i32, i32, i32) {
    %c0_i32 = arith.constant 0 : i32
    %c0_i32_0 = arith.constant 0 : i32
    %c0_i32_1 = arith.constant 0 : i32
    return %arg0, %c0_i32, %c0_i32_0 : i32, i32, i32
  }
}

</mosaic_0001>

<llo_original>
// kernel: tpu_custom_call.1
$region0: #{tpu_custom_call.1}
  #allocation0 [shape = 'u32[]', space=smem, size = 0x4, offset = 0x4, fixed_abs, tag = 'smem constant byte address 0x4 - core index']
  #allocation1 [shape = 'u32[144,128]{1,0:T(1,128)}', space=vmem, size = 0x12000, scoped, tag = 'internal scratch']
  #allocation2 [shape = 'f32[16,32]{1,0:T(8,128)}', space=vmem, size = 0x2000, scoped, tag = 'scratch operand']
  #allocation3 [shape = 'f32[16,128]{1,0:T(8,128)}', space=vmem, size = 0x2000, scoped, tag = 'scratch operand']
  #allocation4 [shape = 'f32[1,1]{1,0:T(1,128)S(1)}', space=vmem, size = 0x200, scoped, tag = 'scoped memory for tpu_custom_call.1']
  %s0 = inlined_call_operand.hbm [shape: f32[16,128], index: 0, kind: input, shape index: {}]
  %s1 = inlined_call_operand.hbm [shape: f32[2,32,128], index: 1, kind: input, shape index: {}]
  %s2 = inlined_call_operand.hbm [shape: f32[2,32,128], index: 2, kind: input, shape index: {}]
  %s3 = inlined_call_operand.hbm [shape: f32[2,1,128], index: 3, kind: input, shape index: {}]
  %s4 = inlined_call_operand.vmem [shape: f32[2,2,32], index: 4, kind: input, shape index: {}]
  %s5 = inlined_call_operand.vmem [shape: f32[2,2,32], index: 5, kind: input, shape index: {}]
  %s6 = inlined_call_operand.vmem [shape: f32[1,32], index: 6, kind: input, shape index: {}]
  %s7 = inlined_call_operand.<no memory space> [shape: f32[1,1], index: 7, kind: input, shape index: {}]
  %s8 = inlined_call_operand.hbm [shape: f32[1,16], index: 8, kind: output, shape index: {0}]
  %s9 = inlined_call_operand.hbm [shape: f32[2,2,32], index: 9, kind: output, shape index: {1}]
  %s10 = inlined_call_operand.hbm [shape: f32[2,2,32], index: 10, kind: output, shape index: {2}]
  %11 = xla_tuple %s8, %s9, %s10
  %s12 = sld [smem:[#allocation0]]
  $region109: #{tpu_custom_call.1} parent=0
    _
  %s14 = ssub.s32 1, %s12
  %s15 = scalar_select 0, %s14, %s12
  %v16 = vstv %s7
  %17 = vst [vmem:[#allocation4] sm:$0x1] %v16
  $region1: #{tpu_custom_call.1} parent=0
    #allocation5 [shape = 'u8[8192]{0}', space=vmem, size = 0x2000, scoped, tag = 'input window, operand 0, single buffered']
    #allocation6 [shape = 's32[2]{0}', space=sflag, size = 0x8, scoped, tag = 'scoped memory for tpu_custom_call.1']
    #allocation7 [shape = 's32[2]{0}', space=sflag, size = 0x8, scoped, tag = 'scoped memory for tpu_custom_call.1']
    #allocation8 [shape = 'u8[32768]{0}', space=vmem, size = 0x8000, scoped, tag = 'input window, operand 1']
    #allocation9 [shape = 's32[2]{0}', space=sflag, size = 0x8, scoped, tag = 'scoped memory for tpu_custom_call.1']
    #allocation10 [shape = 'u8[32768]{0}', space=vmem, size = 0x8000, scoped, tag = 'input window, operand 2']
    #allocation11 [shape = 'u8[1024]{0}', space=vmem, size = 0x400, scoped, tag = 'input window, operand 3']
    #allocation12 [shape = 's32[2]{0}', space=sflag, size = 0x8, scoped, tag = 'scoped memory for tpu_custom_call.1']
    #allocation13 [shape = 'u8[512]{0}', space=vmem, size = 0x400, scoped, tag = 'output window, operand 0, single buffered']
    #allocation14 [shape = 'u8[2048]{0}', space=vmem, size = 0x800, scoped, tag = 'output window, operand 1']
    #allocation15 [shape = 's32[2]{0}', space=sflag, size = 0x8, scoped, tag = 'scoped memory for tpu_custom_call.1']
    #allocation16 [shape = 'u8[2048]{0}', space=vmem, size = 0x800, scoped, tag = 'output window, operand 2']
    %18 = vsyncpa [#allocation6], 0
    %19 = vsyncpa [#allocation9], 0
    %s20 = scalar_lea.sflag [#allocation9], 1
    %21 = vsyncpa %s20, 0
    %22 = vsyncpa [#allocation12], 0
    %s23 = scalar_lea.sflag [#allocation12], 1
    %24 = vsyncpa %s23, 0
    %25 = vsyncpa [#allocation7], 0
    %26 = vsyncpa [#allocation15], 0
    %s27 = scalar_lea.sflag [#allocation15], 1
    %28 = vsyncpa %s27, 0
    loop: start=0, step=1, limit=4
    $region2: #{tpu_custom_call.1} parent=1 // loop_pre_header
      _
    $region3: #{tpu_custom_call.1} parent=1 // loop_header
      %s30 = sphi 0, %s34
      %p31 = scmp.ge.s32.totalorder %s30, 4
      %s38 = sphi 0, %s38
      %s40 = sphi 0, %s38
      %s41 = sphi 0, %s40
      %s55 = sphi 0, %s41
      %s61 = sphi 0, %s63
      %s64 = sphi 0, %s61
      %s65 = sphi 0, %s64
      %s81 = sphi 0, %s65
      %s87 = sphi 0, %s89
      %s90 = sphi 0, %s87
      %s91 = sphi 0, %s90
      %s107 = sphi 0, %s91
      %s113 = sphi 0, %s115
      %s116 = sphi 0, %s113
      %s117 = sphi 0, %s116
      %s133 = sphi 0, %s117
      %s139 = sphi 0, %s141
      %s142 = sphi 0, %s139
      %s143 = sphi 0, %s142
      %s159 = sphi 0, %s143
      %s165 = sphi 0, %s167
      %s168 = sphi 0, %s165
      %s169 = sphi 0, %s168
      %s185 = sphi 0, %s169
      %s189 = sphi 0, %s189
      %s191 = sphi 0, %s189
      %s192 = sphi 0, %s191
      %s206 = sphi 0, %s192
      %s210 = sphi 0, %s210
      %s212 = sphi 0, %s210
      %s213 = sphi 0, %s212
      %s227 = sphi 0, %s213
      %s231 = sphi 0, %s231
      %s233 = sphi 0, %s231
      %s234 = sphi 0, %s233
      %s248 = sphi 0, %s234
      %s254 = sphi 0, %s256
      %s257 = sphi 0, %s254
      %s258 = sphi 0, %s257
      %s274 = sphi 0, %s258
      %s280 = sphi 0, %s282
      %s283 = sphi 0, %s280
      %s284 = sphi 0, %s283
      %s300 = sphi 0, %s284
    $region4: #{tpu_custom_call.1} parent=1 // loop_header_branch
      %33 = sbr.rel (%p31) target = $region8
    $region5: #{tpu_custom_call.1} parent=1 // loop_body
      %s35 = ssub.s32 %s30, 1
      %s36 = ssub.s32 %s30, 2
      %s37 = sadd.s32 %s30, 1
      %s39 = sadd.s32 %s38, 1
      %p42 = scmp.eq.s32.totalorder %s30, 1
      %p43 = scmp.ne.s32.totalorder %s38, %s40
      %p44 = scmp.eq.s32.totalorder %s30, 0
      %p45 = por %p43, %p44
      %p46 = scmp.ne.s32.totalorder %s38, %s40
      %p47 = scmp.eq.s32.totalorder %s35, 1
      %p48 = por %p46, %p47
      %p49 = scmp.ne.s32.totalorder %s40, %s41
      %p50 = scmp.eq.s32.totalorder %s35, 0
      %p51 = por %p49, %p50
      %p52 = scmp.ne.s32.totalorder %s40, %s41
      %p53 = scmp.eq.s32.totalorder %s36, 1
      %p54 = por %p52, %p53
      %p56 = scmp.ne.s32.totalorder %s41, %s55
      %p57 = scmp.eq.s32.totalorder %s36, 0
      %p58 = por %p56, %p57
      %s59 = ssub.s32 %s30, %s37
      %p60 = scmp.eq.s32.totalorder %s59, 0
      %s62 = sadd.s32 %s61, 1
      %s63 = scalar_select %p60, %s61, %s62
      %p66 = pneg %p60
      %p67 = scmp.eq.s32.totalorder %s30, 1
      %p68 = por %p66, %p67
      %p69 = scmp.ne.s32.totalorder %s61, %s64
      %p70 = scmp.eq.s32.totalorder %s30, 0
      %p71 = por %p69, %p70
      %p72 = scmp.ne.s32.totalorder %s61, %s64
      %p73 = scmp.eq.s32.totalorder %s35, 1
      %p74 = por %p72, %p73
      %p75 = scmp.ne.s32.totalorder %s64, %s65
      %p76 = scmp.eq.s32.totalorder %s35, 0
      %p77 = por %p75, %p76
      %p78 = scmp.ne.s32.totalorder %s64, %s65
      %p79 = scmp.eq.s32.totalorder %s36, 1
      %p80 = por %p78, %p79
      %p82 = scmp.ne.s32.totalorder %s65, %s81
      %p83 = scmp.eq.s32.totalorder %s36, 0
      %p84 = por %p82, %p83
      %s85 = ssub.s32 %s30, %s37
      %p86 = scmp.eq.s32.totalorder %s85, 0
      %s88 = sadd.s32 %s87, 1
      %s89 = scalar_select %p86, %s87, %s88
      %p92 = pneg %p86
      %p93 = scmp.eq.s32.totalorder %s30, 1
      %p94 = por %p92, %p93
      %p95 = scmp.ne.s32.totalorder %s87, %s90
      %p96 = scmp.eq.s32.totalorder %s30, 0
      %p97 = por %p95, %p96
      %p98 = scmp.ne.s32.totalorder %s87, %s90
      %p99 = scmp.eq.s32.totalorder %s35, 1
      %p100 = por %p98, %p99
      %p101 = scmp.ne.s32.totalorder %s90, %s91
      %p102 = scmp.eq.s32.totalorder %s35, 0
      %p103 = por %p101, %p102
      %p104 = scmp.ne.s32.totalorder %s90, %s91
      %p105 = scmp.eq.s32.totalorder %s36, 1
      %p106 = por %p104, %p105
      %p108 = scmp.ne.s32.totalorder %s91, %s107
      %p109 = scmp.eq.s32.totalorder %s36, 0
      %p110 = por %p108, %p109
      %s111 = ssub.s32 %s30, %s37
      %p112 = scmp.eq.s32.totalorder %s111, 0
      %s114 = sadd.s32 %s113, 1
      %s115 = scalar_select %p112, %s113, %s114
      %p118 = pneg %p112
      %p119 = scmp.eq.s32.totalorder %s30, 1
      %p120 = por %p118, %p119
      %p121 = scmp.ne.s32.totalorder %s113, %s116
      %p122 = scmp.eq.s32.totalorder %s30, 0
      %p123 = por %p121, %p122
      %p124 = scmp.ne.s32.totalorder %s113, %s116
      %p125 = scmp.eq.s32.totalorder %s35, 1
      %p126 = por %p124, %p125
      %p127 = scmp.ne.s32.totalorder %s116, %s117
      %p128 = scmp.eq.s32.totalorder %s35, 0
      %p129 = por %p127, %p128
      %p130 = scmp.ne.s32.totalorder %s116, %s117
      %p131 = scmp.eq.s32.totalorder %s36, 1
      %p132 = por %p130, %p131
      %p134 = scmp.ne.s32.totalorder %s117, %s133
      %p135 = scmp.eq.s32.totalorder %s36, 0
      %p136 = por %p134, %p135
      %s137 = ssub.s32 %s30, %s37
      %p138 = scmp.eq.s32.totalorder %s137, 0
      %s140 = sadd.s32 %s139, 1
      %s141 = scalar_select %p138, %s139, %s140
      %p144 = pneg %p138
      %p145 = scmp.eq.s32.totalorder %s30, 1
      %p146 = por %p144, %p145
      %p147 = scmp.ne.s32.totalorder %s139, %s142
      %p148 = scmp.eq.s32.totalorder %s30, 0
      %p149 = por %p147, %p148
      %p150 = scmp.ne.s32.totalorder %s139, %s142
      %p151 = scmp.eq.s32.totalorder %s35, 1
      %p152 = por %p150, %p151
      %p153 = scmp.ne.s32.totalorder %s142, %s143
      %p154 = scmp.eq.s32.totalorder %s35, 0
      %p155 = por %p153, %p154
      %p156 = scmp.ne.s32.totalorder %s142, %s143
      %p157 = scmp.eq.s32.totalorder %s36, 1
      %p158 = por %p156, %p157
      %p160 = scmp.ne.s32.totalorder %s143, %s159
      %p161 = scmp.eq.s32.totalorder %s36, 0
      %p162 = por %p160, %p161
      %s163 = ssub.s32 %s30, %s37
      %p164 = scmp.eq.s32.totalorder %s163, 0
      %s166 = sadd.s32 %s165, 1
      %s167 = scalar_select %p164, %s165, %s166
      %p170 = pneg %p164
      %p171 = scmp.eq.s32.totalorder %s30, 1
      %p172 = por %p170, %p171
      %p173 = scmp.ne.s32.totalorder %s165, %s168
      %p174 = scmp.eq.s32.totalorder %s30, 0
      %p175 = por %p173, %p174
      %p176 = scmp.ne.s32.totalorder %s165, %s168
      %p177 = scmp.eq.s32.totalorder %s35, 1
      %p178 = por %p176, %p177
      %p179 = scmp.ne.s32.totalorder %s168, %s169
      %p180 = scmp.eq.s32.totalorder %s35, 0
      %p181 = por %p179, %p180
      %p182 = scmp.ne.s32.totalorder %s168, %s169
      %p183 = scmp.eq.s32.totalorder %s36, 1
      %p184 = por %p182, %p183
      %p186 = scmp.ne.s32.totalorder %s169, %s185
      %p187 = scmp.eq.s32.totalorder %s36, 0
      %p188 = por %p186, %p187
      %s190 = sadd.s32 %s189, 1
      %p193 = scmp.eq.s32.totalorder %s30, 1
      %p194 = scmp.ne.s32.totalorder %s189, %s191
      %p195 = scmp.eq.s32.totalorder %s30, 0
      %p196 = por %p194, %p195
      %p197 = scmp.ne.s32.totalorder %s189, %s191
      %p198 = scmp.eq.s32.totalorder %s35, 1
      %p199 = por %p197, %p198
      %p200 = scmp.ne.s32.totalorder %s191, %s192
      %p201 = scmp.eq.s32.totalorder %s35, 0
      %p202 = por %p200, %p201
      %p203 = scmp.ne.s32.totalorder %s191, %s192
      %p204 = scmp.eq.s32.totalorder %s36, 1
      %p205 = por %p203, %p204
      %p207 = scmp.ne.s32.totalorder %s192, %s206
      %p208 = scmp.eq.s32.totalorder %s36, 0
      %p209 = por %p207, %p208
      %s211 = sadd.s32 %s210, 1
      %p214 = scmp.eq.s32.totalorder %s30, 1
      %p215 = scmp.ne.s32.totalorder %s210, %s212
      %p216 = scmp.eq.s32.totalorder %s30, 0
      %p217 = por %p215, %p216
      %p218 = scmp.ne.s32.totalorder %s210, %s212
      %p219 = scmp.eq.s32.totalorder %s35, 1
      %p220 = por %p218, %p219
      %p221 = scmp.ne.s32.totalorder %s212, %s213
      %p222 = scmp.eq.s32.totalorder %s35, 0
      %p223 = por %p221, %p222
      %p224 = scmp.ne.s32.totalorder %s212, %s213
      %p225 = scmp.eq.s32.totalorder %s36, 1
      %p226 = por %p224, %p225
      %p228 = scmp.ne.s32.totalorder %s213, %s227
      %p229 = scmp.eq.s32.totalorder %s36, 0
      %p230 = por %p228, %p229
      %s232 = sadd.s32 %s231, 1
      %p235 = scmp.eq.s32.totalorder %s30, 1
      %p236 = scmp.ne.s32.totalorder %s231, %s233
      %p237 = scmp.eq.s32.totalorder %s30, 0
      %p238 = por %p236, %p237
      %p239 = scmp.ne.s32.totalorder %s231, %s233
      %p240 = scmp.eq.s32.totalorder %s35, 1
      %p241 = por %p239, %p240
      %p242 = scmp.ne.s32.totalorder %s233, %s234
      %p243 = scmp.eq.s32.totalorder %s35, 0
      %p244 = por %p242, %p243
      %p245 = scmp.ne.s32.totalorder %s233, %s234
      %p246 = scmp.eq.s32.totalorder %s36, 1
      %p247 = por %p245, %p246
      %p249 = scmp.ne.s32.totalorder %s234, %s248
      %p250 = scmp.eq.s32.totalorder %s36, 0
      %p251 = por %p249, %p250
      %s252 = ssub.s32 %s30, %s37
      %p253 = scmp.eq.s32.totalorder %s252, 0
      %s255 = sadd.s32 %s254, 1
      %s256 = scalar_select %p253, %s254, %s255
      %p259 = pneg %p253
      %p260 = scmp.eq.s32.totalorder %s30, 1
      %p261 = por %p259, %p260
      %p262 = scmp.ne.s32.totalorder %s254, %s257
      %p263 = scmp.eq.s32.totalorder %s30, 0
      %p264 = por %p262, %p263
      %p265 = scmp.ne.s32.totalorder %s254, %s257
      %p266 = scmp.eq.s32.totalorder %s35, 1
      %p267 = por %p265, %p266
      %p268 = scmp.ne.s32.totalorder %s257, %s258
      %p269 = scmp.eq.s32.totalorder %s35, 0
      %p270 = por %p268, %p269
      %p271 = scmp.ne.s32.totalorder %s257, %s258
      %p272 = scmp.eq.s32.totalorder %s36, 1
      %p273 = por %p271, %p272
      %p275 = scmp.ne.s32.totalorder %s258, %s274
      %p276 = scmp.eq.s32.totalorder %s36, 0
      %p277 = por %p275, %p276
      %s278 = ssub.s32 %s30, %s37
      %p279 = scmp.eq.s32.totalorder %s278, 0
      %s281 = sadd.s32 %s280, 1
      %s282 = scalar_select %p279, %s280, %s281
      %p285 = pneg %p279
      %p286 = scmp.eq.s32.totalorder %s30, 1
      %p287 = por %p285, %p286
      %p288 = scmp.ne.s32.totalorder %s280, %s283
      %p289 = scmp.eq.s32.totalorder %s30, 0
      %p290 = por %p288, %p289
      %p291 = scmp.ne.s32.totalorder %s280, %s283
      %p292 = scmp.eq.s32.totalorder %s35, 1
      %p293 = por %p291, %p292
      %p294 = scmp.ne.s32.totalorder %s283, %s284
      %p295 = scmp.eq.s32.totalorder %s35, 0
      %p296 = por %p294, %p295
      %p297 = scmp.ne.s32.totalorder %s283, %s284
      %p298 = scmp.eq.s32.totalorder %s36, 1
      %p299 = por %p297, %p298
      %p301 = scmp.ne.s32.totalorder %s284, %s300
      %p302 = scmp.eq.s32.totalorder %s36, 0
      %p303 = por %p301, %p302
      %p304 = scmp.le.s32.totalorder 1, %s30
      %p305 = scmp.lt.s32.totalorder %s30, 3
      %p306 = pnand %p304, %p305
      %p307 = pneg %p306
      // Predicated region
      $region9: #{tpu_custom_call.1} parent=5 // pred_check
        _
      $region10: #{tpu_custom_call.1} parent=5 // pred_check_branch
        %309 = sbr.rel (%p306) target = $region12
      $region11: #{tpu_custom_call.1} parent=5 // pred_region
        %s310 = ssub.s32 %s30, 1
        // Predicated region
        $region13: #{tpu_custom_call.1} parent=11 // pred_check
          %p311 = pneg %p51
        $region14: #{tpu_custom_call.1} parent=11 // pred_check_branch
          %313 = sbr.rel (%p311) target = $region16
        $region15: #{tpu_custom_call.1} parent=11 // pred_region
          %s315 = ssub.s32 256, 256
          %316 = vsyncadd [#allocation6], %s315
          %s317 = sshll.u32 [#allocation5], 4
          %s318 = int_to_ptr.vmem [resolvable:$true] %s317
          %323 = dma.hbm_to_vmem [thread:$0]  %s0, 256, %s318, [#allocation6], 128, 128, 8
        $region16: #{tpu_custom_call.1} parent=11 // pred_fallthru
          _
        // Predicated region
        $region17: #{tpu_custom_call.1} parent=11 // pred_check
          %p324 = pneg %p202
        $region18: #{tpu_custom_call.1} parent=11 // pred_check_branch
          %326 = sbr.rel (%p324) target = $region20
        $region19: #{tpu_custom_call.1} parent=11 // pred_region
          _
        $region20: #{tpu_custom_call.1} parent=11 // pred_fallthru
          _
        // Predicated region
        $region21: #{tpu_custom_call.1} parent=11 // pred_check
          %p327 = pneg %p223
        $region22: #{tpu_custom_call.1} parent=11 // pred_check_branch
          %329 = sbr.rel (%p327) target = $region24
        $region23: #{tpu_custom_call.1} parent=11 // pred_region
          _
        $region24: #{tpu_custom_call.1} parent=11 // pred_fallthru
          _
      $region12: #{tpu_custom_call.1} parent=5 // pred_fallthru
        _
      %p330 = scmp.lt.s32.totalorder %s30, 2
      // Predicated region
      $region25: #{tpu_custom_call.1} parent=5 // pred_check
        %p331 = pneg %p330
      $region26: #{tpu_custom_call.1} parent=5 // pred_check_branch
        %333 = sbr.rel (%p331) target = $region28
      $region27: #{tpu_custom_call.1} parent=5 // pred_region
        // Predicated region
        $region29: #{tpu_custom_call.1} parent=27 // pred_check
          %p334 = pneg %p71
        $region30: #{tpu_custom_call.1} parent=27 // pred_check_branch
          %336 = sbr.rel (%p334) target = $region32
        $region31: #{tpu_custom_call.1} parent=27 // pred_region
          %s337 = sand.u32 %s30, 1
          %s338 = scalar_lea.sflag [#allocation9], %s337
          %s339 = sand.u32 %s61, 1
          %s340 = smul.addr %s339, 32
          %s341 = scalar_lea.vmem [#allocation8], %s340
          %s343 = ssub.s32 512, 512
          %344 = vsyncadd %s338, %s343
          %s345 = smul.addr %s30, 4
          %s346 = smul.addr %s345, 128
          %s347 = scalar_lea.hbm %s1, %s346
          %s348 = sshll.u32 %s341, 4
          %s349 = int_to_ptr.vmem [resolvable:$true] %s348
          %354 = dma.hbm_to_vmem [thread:$0]  %s347, 512, %s349, %s338, 128, 128, 8
        $region32: #{tpu_custom_call.1} parent=27 // pred_fallthru
          _
        // Predicated region
        $region33: #{tpu_custom_call.1} parent=27 // pred_check
          %p355 = pneg %p97
        $region34: #{tpu_custom_call.1} parent=27 // pred_check_branch
          %357 = sbr.rel (%p355) target = $region36
        $region35: #{tpu_custom_call.1} parent=27 // pred_region
          %s358 = sand.u32 %s30, 1
          %s359 = scalar_lea.sflag [#allocation9], %s358
          %s360 = sand.u32 %s87, 1
          %s361 = smul.addr %s360, 32
          %s362 = scalar_lea.vmem [#allocation10], %s361
          %s364 = ssub.s32 512, 512
          %365 = vsyncadd %s359, %s364
          %s366 = smul.addr %s30, 4
          %s367 = smul.addr %s366, 128
          %s368 = scalar_lea.hbm %s2, %s367
          %s369 = sshll.u32 %s362, 4
          %s370 = int_to_ptr.vmem [resolvable:$true] %s369
          %375 = dma.hbm_to_vmem [thread:$0]  %s368, 512, %s370, %s359, 128, 128, 8
        $region36: #{tpu_custom_call.1} parent=27 // pred_fallthru
          _
        // Predicated region
        $region37: #{tpu_custom_call.1} parent=27 // pred_check
          %p376 = pneg %p123
        $region38: #{tpu_custom_call.1} parent=27 // pred_check_branch
          %378 = sbr.rel (%p376) target = $region40
        $region39: #{tpu_custom_call.1} parent=27 // pred_region
          %s379 = sand.u32 %s113, 1
          %s380 = scalar_lea.sflag [#allocation12], %s379
          %s381 = sand.u32 %s113, 1
          %s382 = scalar_lea.vmem [#allocation11], %s381
          %s384 = ssub.s32 16, 16
          %385 = vsyncadd %s380, %s384
          %s386 = smul.addr %s30, 16
          %s387 = scalar_lea.hbm %s3, %s386
          %s389 = sshll.u32 %s382, 4
          %s390 = int_to_ptr.vmem [resolvable:$true] %s389
          %392 = dma.hbm_to_vmem [thread:$0]  %s387, 16, %s390, %s380
        $region40: #{tpu_custom_call.1} parent=27 // pred_fallthru
          _
        // Predicated region
        $region41: #{tpu_custom_call.1} parent=27 // pred_check
          %p393 = pneg %p149
        $region42: #{tpu_custom_call.1} parent=27 // pred_check_branch
          %395 = sbr.rel (%p393) target = $region44
        $region43: #{tpu_custom_call.1} parent=27 // pred_region
          %p396 = scmp.lt.s32.totalorder %s30, 1
          %s397 = scalar_select %p396, %s30, 1
          %s398 = smul.addr %s397, 2
          %s399 = scalar_lea.vmem %s4, %s398
        $region44: #{tpu_custom_call.1} parent=27 // pred_fallthru
          _
        // Predicated region
        $region45: #{tpu_custom_call.1} parent=27 // pred_check
          %p400 = pneg %p175
        $region46: #{tpu_custom_call.1} parent=27 // pred_check_branch
          %402 = sbr.rel (%p400) target = $region48
        $region47: #{tpu_custom_call.1} parent=27 // pred_region
          %p403 = scmp.lt.s32.totalorder %s30, 1
          %s404 = scalar_select %p403, %s30, 1
          %s405 = smul.addr %s404, 2
          %s406 = scalar_lea.vmem %s5, %s405
        $region48: #{tpu_custom_call.1} parent=27 // pred_fallthru
          _
      $region28: #{tpu_custom_call.1} parent=5 // pred_fallthru
        _
      %p407 = scmp.le.s32.totalorder 1, %s30
      %p408 = scmp.lt.s32.totalorder %s30, 3
      %p409 = pnand %p407, %p408
      %p410 = pneg %p409
      // Predicated region
      $region49: #{tpu_custom_call.1} parent=5 // pred_check
        _
      $region50: #{tpu_custom_call.1} parent=5 // pred_check_branch
        %412 = sbr.rel (%p409) target = $region52
      $region51: #{tpu_custom_call.1} parent=5 // pred_region
        %s413 = ssub.s32 %s30, 1
        // Predicated region
        $region53: #{tpu_custom_call.1} parent=51 // pred_check
          %p414 = pneg %p51
        $region54: #{tpu_custom_call.1} parent=51 // pred_check_branch
          %416 = sbr.rel (%p414) target = $region56
        $region55: #{tpu_custom_call.1} parent=51 // pred_region
          %417 = dma.done [#allocation6], 256
        $region56: #{tpu_custom_call.1} parent=51 // pred_fallthru
          _
        %s418 = sand.u32 %s35, 1
        %s419 = scalar_lea.sflag [#allocation9], %s418
        %s420 = sand.u32 %s64, 1
        %s421 = smul.addr %s420, 32
        %s422 = scalar_lea.vmem [#allocation8], %s421
        // Predicated region
        $region57: #{tpu_custom_call.1} parent=51 // pred_check
          %p423 = pneg %p77
        $region58: #{tpu_custom_call.1} parent=51 // pred_check_branch
          %425 = sbr.rel (%p423) target = $region60
        $region59: #{tpu_custom_call.1} parent=51 // pred_region
          %426 = dma.done %s419, 512
        $region60: #{tpu_custom_call.1} parent=51 // pred_fallthru
          _
        %s427 = sand.u32 %s35, 1
        %s428 = scalar_lea.sflag [#allocation9], %s427
        %s429 = sand.u32 %s90, 1
        %s430 = smul.addr %s429, 32
        %s431 = scalar_lea.vmem [#allocation10], %s430
        // Predicated region
        $region61: #{tpu_custom_call.1} parent=51 // pred_check
          %p432 = pneg %p103
        $region62: #{tpu_custom_call.1} parent=51 // pred_check_branch
          %434 = sbr.rel (%p432) target = $region64
        $region63: #{tpu_custom_call.1} parent=51 // pred_region
          %435 = dma.done %s428, 512
        $region64: #{tpu_custom_call.1} parent=51 // pred_fallthru
          _
        %s436 = sand.u32 %s116, 1
        %s437 = scalar_lea.sflag [#allocation12], %s436
        %s438 = sand.u32 %s116, 1
        %s439 = scalar_lea.vmem [#allocation11], %s438
        // Predicated region
        $region65: #{tpu_custom_call.1} parent=51 // pred_check
          %p440 = pneg %p129
        $region66: #{tpu_custom_call.1} parent=51 // pred_check_branch
          %442 = sbr.rel (%p440) target = $region68
        $region67: #{tpu_custom_call.1} parent=51 // pred_region
          %443 = dma.done %s437, 16
        $region68: #{tpu_custom_call.1} parent=51 // pred_fallthru
          _
        %p444 = pneg %p51
        %p445 = pneg %p48
        %s446 = sand.u32 %s35, 1
        %s447 = scalar_lea.sflag [#allocation9], %s446
        %s448 = sand.u32 %s64, 1
        %s449 = smul.addr %s448, 32
        %s450 = scalar_lea.vmem [#allocation8], %s449
        %p451 = pneg %p77
        %p452 = pneg %p74
        %s453 = sand.u32 %s35, 1
        %s454 = scalar_lea.sflag [#allocation9], %s453
        %s455 = sand.u32 %s90, 1
        %s456 = smul.addr %s455, 32
        %s457 = scalar_lea.vmem [#allocation10], %s456
        %p458 = pneg %p103
        %p459 = pneg %p100
        %s460 = sand.u32 %s116, 1
        %s461 = scalar_lea.sflag [#allocation12], %s460
        %s462 = sand.u32 %s116, 1
        %s463 = scalar_lea.vmem [#allocation11], %s462
        %p464 = pneg %p129
        %p465 = pneg %p126
        %p466 = scmp.lt.s32.totalorder %s35, 1
        %s467 = scalar_select %p466, %s35, 1
        %s468 = smul.addr %s467, 2
        %s469 = scalar_lea.vmem %s4, %s468
        %p470 = pneg %p155
        %p471 = pneg %p152
        %p472 = scmp.lt.s32.totalorder %s35, 1
        %s473 = scalar_select %p472, %s35, 1
        %s474 = smul.addr %s473, 2
        %s475 = scalar_lea.vmem %s5, %s474
        %p476 = pneg %p181
        %p477 = pneg %p178
        %p478 = pneg %p202
        %p479 = pneg %p199
        %p480 = pneg %p223
        %p481 = pneg %p220
        %p482 = pneg %p244
        %p483 = pneg %p241
        %p484 = pneg %p270
        %p485 = pneg %p267
        %s486 = sand.u32 %s35, 1
        %s487 = scalar_lea.sflag [#allocation15], %s486
        %s488 = sand.u32 %s257, 1
        %s489 = smul.addr %s488, 2
        %s490 = scalar_lea.vmem [#allocation14], %s489
        %p491 = pneg %p296
        %p492 = pneg %p293
        %s493 = sand.u32 %s35, 1
        %s494 = scalar_lea.sflag [#allocation15], %s493
        %s495 = sand.u32 %s283, 1
        %s496 = smul.addr %s495, 2
        %s497 = scalar_lea.vmem [#allocation16], %s496
        %p498 = scmp.lt.s32.totalorder %s35, 1
        %s499 = scalar_select %p498, %s35, 1
        %s500 = smul.addr %s499, 2
        %s501 = scalar_lea.vmem %s4, %s500
        %p502 = scmp.lt.s32.totalorder %s35, 1
        %s503 = scalar_select %p502, %s35, 1
        %s504 = smul.addr %s503, 2
        %s505 = scalar_lea.vmem %s5, %s504
        %p506 = scmp.eq.s32.totalorder %s35, 0
        // Predicated region
        $region69: #{tpu_custom_call.1} parent=51 // pred_check
          %p507 = pneg %p506
        $region70: #{tpu_custom_call.1} parent=51 // pred_check_branch
          %509 = sbr.rel (%p507) target = $region72
        $region71: #{tpu_custom_call.1} parent=51 // pred_region
          %v510 = vld [vmem:[#allocation5] sm:$0xff]
          %v511 = vld [vmem:[#allocation5 + $0x8] sm:$0xff]
          %512 = vst [vmem:[#allocation3] sm:$0xff] %v510
          %513 = vst [vmem:[#allocation3 + $0x8] sm:$0xff] %v511
        $region72: #{tpu_custom_call.1} parent=51 // pred_fallthru
          _
        %p514 = scmp.ne.s32.totalorder %s35, 0
        // Predicated region
        $region73: #{tpu_custom_call.1} parent=51 // pred_check
          %p515 = pneg %p514
        $region74: #{tpu_custom_call.1} parent=51 // pred_check_branch
          %517 = sbr.rel (%p515) target = $region76
        $region75: #{tpu_custom_call.1} parent=51 // pred_region
          %v518 = vld [vmem:[#allocation2] sm:$0xff]
          %v519 = vld [vmem:[#allocation2 + $0x8] sm:$0xff]
          %v520 = vld [vmem:[%s422] sm:$0xff]
          %v521 = vld [vmem:[%s422 + $0x8] sm:$0xff]
          %v522 = vld [vmem:[%s422 + $0x10] sm:$0xff]
          %v523 = vld [vmem:[%s422 + $0x18] sm:$0xff]
          %v524 = vld [vmem:[%s439] sm:$0x1]
          %v526 = vlaneseq
          %v527 = vshrl.u32 %v526, 7
          %v528 = vsub.s32 0, %v527
          %v529 = vrot.slane %v524, %v528
          %vm531 = vcmask 261120
          %v533 = vsel %vm531, %v518, 0
          %v536 = vsel %vm531, %v519, 0
          %538 = vmatprep.subr.mxu0 0.0
          %539 = vmatpush1.msra.mxu0 0.0
          %540 = vmatprep.subr.mxu0 0.0
          %541 = vmatpush1.msra.mxu0 0.0
          %542 = vmatprep.subr.mxu0 0.0
          %543 = vmatpush1.msra.mxu0 0.0
          %544 = vmatprep.subr.mxu0 0.0
          %545 = vmatpush1.msra.mxu0 0.0
          %546 = vmatprep.subr.mxu0 0.0
          %547 = vmatpush1.msra.mxu0 0.0
          %548 = vmatprep.subr.mxu0 0.0
          %549 = vmatpush1.msra.mxu0 0.0
          %550 = vmatprep.subr.mxu0 0.0
          %551 = vmatpush1.msra.mxu0 0.0
          %552 = vmatprep.subr.mxu0 0.0
          %553 = vmatpush1.msra.mxu0 0.0
          %554 = vmatprep.subr.mxu0 0.0
          %555 = vmatpush1.msra.mxu0 0.0
          %556 = vmatprep.subr.mxu0 0.0
          %557 = vmatpush1.msra.mxu0 0.0
          %558 = vmatprep.subr.mxu0 0.0
          %559 = vmatpush1.msra.mxu0 0.0
          %560 = vmatprep.subr.mxu0 0.0
          %561 = vmatpush1.msra.mxu0 0.0
          %562 = vmatprep.subr.mxu0 0.0
          %563 = vmatpush1.msra.mxu0 %v523
          %564 = vmatprep.subr.mxu0 0.0
          %565 = vmatpush1.msra.mxu0 %v522
          %566 = vmatprep.subr.mxu0 0.0
          %567 = vmatpush1.msra.mxu0 %v521
          %568 = vmatprep.subr.mxu0 0.0
          %569 = vmatpush1.msra.mxu0 %v520
          %570 = vmatprep.subr.mxu0 0.0
          %571 = vmatpush2.msra.mxu0 0.0
          %572 = vmatprep.subr.mxu0 0.0
          %573 = vmatpush2.msra.mxu0 0.0
          %574 = vmatprep.subr.mxu0 0.0
          %575 = vmatpush2.msra.mxu0 0.0
          %576 = vmatprep.subr.mxu0 0.0
          %577 = vmatpush2.msra.mxu0 0.0
          %578 = vmatprep.subr.mxu0 0.0
          %579 = vmatpush2.msra.mxu0 0.0
          %580 = vmatprep.subr.mxu0 0.0
          %581 = vmatpush2.msra.mxu0 0.0
          %582 = vmatprep.subr.mxu0 0.0
          %583 = vmatpush2.msra.mxu0 0.0
          %584 = vmatprep.subr.mxu0 0.0
          %585 = vmatpush2.msra.mxu0 0.0
          %586 = vmatprep.subr.mxu0 0.0
          %587 = vmatpush2.msra.mxu0 0.0
          %588 = vmatprep.subr.mxu0 0.0
          %589 = vmatpush2.msra.mxu0 0.0
          %590 = vmatprep.subr.mxu0 0.0
          %591 = vmatpush2.msra.mxu0 0.0
          %592 = vmatprep.subr.mxu0 0.0
          %593 = vmatpush2.msra.mxu0 0.0
          %594 = vmatprep.subr.mxu0 0.0
          %595 = vmatpush2.msra.mxu0 0.0
          %596 = vmatprep.subr.mxu0 0.0
          %597 = vmatpush2.msra.mxu0 0.0
          %598 = vmatprep.subr.mxu0 0.0
          %599 = vmatpush2.msra.mxu0 0.0
          %600 = vmatprep.subr.mxu0 0.0
          %601 = vmatpush2.msra.mxu0 0.0
          %602 = vmatprep.mubr.f32.mxu0 0.0
          %603 = vmatmul.mubr.f32.gmra.mxu0 %v533
          %v604 = vpop.f32.mrf.mxu0
          %v605 = vadd.f32 %v529, %v604
          %v606 = vpop.f32.mrf.mxu0
          %607 = vmatprep.mubr.f32.mxu0 0.0
          %608 = vmatmul.mubr.f32.gmra.mxu0 %v536
          %v609 = vpop.f32.mrf.mxu0
          %v610 = vadd.f32 %v529, %v609
          %v611 = vpop.f32.mrf.mxu0
          %612 = vdwg.mxu0
          %613 = vst [vmem:[#allocation3] sm:$0xff] %v605
          %614 = vst [vmem:[#allocation3 + $0x8] sm:$0xff] %v610
        $region76: #{tpu_custom_call.1} parent=51 // pred_fallthru
          _
        %v615 = vld [vmem:[%s431] sm:$0xff]
        %v616 = vld [vmem:[%s431 + $0x8] sm:$0xff]
        %v617 = vld [vmem:[%s431 + $0x10] sm:$0xff]
        %v618 = vld [vmem:[%s431 + $0x18] sm:$0xff]
        %v619 = vld [vmem:[%s501] sm:$0x3]
        %v620 = vld [vmem:[%s505] sm:$0x3]
        %v621 = vld [vmem:[#allocation3] sm:$0x3]
        %vm622 = vcmask 261120
        %v624 = vsel %vm622, %v619, 0
        %626 = vmatprep.subr.mxu0 0.0
        %627 = vmatpush1.msra.mxu0 0.0
        %628 = vmatprep.subr.mxu0 0.0
        %629 = vmatpush1.msra.mxu0 0.0
        %630 = vmatprep.subr.mxu0 0.0
        %631 = vmatpush1.msra.mxu0 0.0
        %632 = vmatprep.subr.mxu0 0.0
        %633 = vmatpush1.msra.mxu0 0.0
        %634 = vmatprep.subr.mxu0 0.0
        %635 = vmatpush1.msra.mxu0 0.0
        %636 = vmatprep.subr.mxu0 0.0
        %637 = vmatpush1.msra.mxu0 0.0
        %638 = vmatprep.subr.mxu0 0.0
        %639 = vmatpush1.msra.mxu0 0.0
        %640 = vmatprep.subr.mxu0 0.0
        %641 = vmatpush1.msra.mxu0 0.0
        %642 = vmatprep.subr.mxu0 0.0
        %643 = vmatpush1.msra.mxu0 0.0
        %644 = vmatprep.subr.mxu0 0.0
        %645 = vmatpush1.msra.mxu0 0.0
        %646 = vmatprep.subr.mxu0 0.0
        %647 = vmatpush1.msra.mxu0 0.0
        %648 = vmatprep.subr.mxu0 0.0
        %649 = vmatpush1.msra.mxu0 0.0
        %650 = vmatprep.subr.mxu0 0.0
        %651 = vmatpush1.msra.mxu0 %v618
        %652 = vmatprep.subr.mxu0 0.0
        %653 = vmatpush1.msra.mxu0 %v617
        %654 = vmatprep.subr.mxu0 0.0
        %655 = vmatpush1.msra.mxu0 %v616
        %656 = vmatprep.subr.mxu0 0.0
        %657 = vmatpush1.msra.mxu0 %v615
        %658 = vmatprep.subr.mxu0 0.0
        %659 = vmatpush2.msra.mxu0 0.0
        %660 = vmatprep.subr.mxu0 0.0
        %661 = vmatpush2.msra.mxu0 0.0
        %662 = vmatprep.subr.mxu0 0.0
        %663 = vmatpush2.msra.mxu0 0.0
        %664 = vmatprep.subr.mxu0 0.0
        %665 = vmatpush2.msra.mxu0 0.0
        %666 = vmatprep.subr.mxu0 0.0
        %667 = vmatpush2.msra.mxu0 0.0
        %668 = vmatprep.subr.mxu0 0.0
        %669 = vmatpush2.msra.mxu0 0.0
        %670 = vmatprep.subr.mxu0 0.0
        %671 = vmatpush2.msra.mxu0 0.0
        %672 = vmatprep.subr.mxu0 0.0
        %673 = vmatpush2.msra.mxu0 0.0
        %674 = vmatprep.subr.mxu0 0.0
        %675 = vmatpush2.msra.mxu0 0.0
        %676 = vmatprep.subr.mxu0 0.0
        %677 = vmatpush2.msra.mxu0 0.0
        %678 = vmatprep.subr.mxu0 0.0
        %679 = vmatpush2.msra.mxu0 0.0
        %680 = vmatprep.subr.mxu0 0.0
        %681 = vmatpush2.msra.mxu0 0.0
        %682 = vmatprep.subr.mxu0 0.0
        %683 = vmatpush2.msra.mxu0 0.0
        %684 = vmatprep.subr.mxu0 0.0
        %685 = vmatpush2.msra.mxu0 0.0
        %686 = vmatprep.subr.mxu0 0.0
        %687 = vmatpush2.msra.mxu0 0.0
        %688 = vmatprep.subr.mxu0 0.0
        %689 = vmatpush2.msra.mxu0 0.0
        %690 = vmatprep.mubr.f32.mxu0 0.0
        %691 = vmatmul.mubr.f32.gmra.mxu0 %v624
        %v692 = vpop.f32.mrf.mxu0
        %v693 = vadd.f32 0.0, %v692
        %v694 = vpop.f32.mrf.mxu0
        %695 = vdwg.mxu0
        %v696 = vadd.f32 %v621, %v693
        %v697 = vxor.u32 %v696, 2147483648
        %v698 = vmul.f32 %v697, 1.442695
        %v699 = vpow.pop %v698
        %v700 = vadd.f32 %v699, 1.0
        %v701 = vrcp.pop %v700
        %v702 = vmul.f32 1.0, %v701
        %v703 = vtanh.pop %v696
        %705 = vrot.lane.b32.xlu0 %v620, 32
        %v706 = vpop.permute.xlu0 %705
        %v708 = vmul.f32 %v702, %v706
        %710 = vrot.lane.b32.xlu0 %v703, 64
        %v711 = vpop.permute.xlu0 %710
        %v713 = vmul.f32 %v702, %v711
        %715 = vrot.lane.b32.xlu0 %v713, 32
        %v716 = vpop.permute.xlu0 %715
        %v718 = vadd.f32 %v708, %v716
        %v719 = vtanh.pop %v718
        %721 = vrot.lane.b32.xlu0 %v719, 64
        %v722 = vpop.permute.xlu0 %721
        %v724 = vmul.f32 %v702, %v722
        %726 = vrot.lane.b32.xlu0 %v724, 32
        %v727 = vpop.permute.xlu0 %726
        %vm729 = vcmask 254976
        %730 = vst.msk [vmem:[#allocation2] sm:$0x3] %vm729, %v727
        %v731 = vld [vmem:[#allocation3 + $0x2] sm:$0x3]
        %v732 = vsel %vm622, %v727, 0
        %734 = vmatprep.subr.mxu0 0.0
        %735 = vmatpush1.msra.mxu0 0.0
        %736 = vmatprep.subr.mxu0 0.0
        %737 = vmatpush1.msra.mxu0 0.0
        %738 = vmatprep.subr.mxu0 0.0
        %739 = vmatpush1.msra.mxu0 0.0
        %740 = vmatprep.subr.mxu0 0.0
        %741 = vmatpush1.msra.mxu0 0.0
        %742 = vmatprep.subr.mxu0 0.0
        %743 = vmatpush1.msra.mxu0 0.0
        %744 = vmatprep.subr.mxu0 0.0
        %745 = vmatpush1.msra.mxu0 0.0
        %746 = vmatprep.subr.mxu0 0.0
        %747 = vmatpush1.msra.mxu0 0.0
        %748 = vmatprep.subr.mxu0 0.0
        %749 = vmatpush1.msra.mxu0 0.0
        %750 = vmatprep.subr.mxu0 0.0
        %751 = vmatpush1.msra.mxu0 0.0
        %752 = vmatprep.subr.mxu0 0.0
        %753 = vmatpush1.msra.mxu0 0.0
        %754 = vmatprep.subr.mxu0 0.0
        %755 = vmatpush1.msra.mxu0 0.0
        %756 = vmatprep.subr.mxu0 0.0
        %757 = vmatpush1.msra.mxu0 0.0
        %758 = vmatprep.subr.mxu0 0.0
        %759 = vmatpush1.msra.mxu0 %v618
        %760 = vmatprep.subr.mxu0 0.0
        %761 = vmatpush1.msra.mxu0 %v617
        %762 = vmatprep.subr.mxu0 0.0
        %763 = vmatpush1.msra.mxu0 %v616
        %764 = vmatprep.subr.mxu0 0.0
        %765 = vmatpush1.msra.mxu0 %v615
        %766 = vmatprep.subr.mxu0 0.0
        %767 = vmatpush2.msra.mxu0 0.0
        %768 = vmatprep.subr.mxu0 0.0
        %769 = vmatpush2.msra.mxu0 0.0
        %770 = vmatprep.subr.mxu0 0.0
        %771 = vmatpush2.msra.mxu0 0.0
        %772 = vmatprep.subr.mxu0 0.0
        %773 = vmatpush2.msra.mxu0 0.0
        %774 = vmatprep.subr.mxu0 0.0
        %775 = vmatpush2.msra.mxu0 0.0
        %776 = vmatprep.subr.mxu0 0.0
        %777 = vmatpush2.msra.mxu0 0.0
        %778 = vmatprep.subr.mxu0 0.0
        %779 = vmatpush2.msra.mxu0 0.0
        %780 = vmatprep.subr.mxu0 0.0
        %781 = vmatpush2.msra.mxu0 0.0
        %782 = vmatprep.subr.mxu0 0.0
        %783 = vmatpush2.msra.mxu0 0.0
        %784 = vmatprep.subr.mxu0 0.0
        %785 = vmatpush2.msra.mxu0 0.0
        %786 = vmatprep.subr.mxu0 0.0
        %787 = vmatpush2.msra.mxu0 0.0
        %788 = vmatprep.subr.mxu0 0.0
        %789 = vmatpush2.msra.mxu0 0.0
        %790 = vmatprep.subr.mxu0 0.0
        %791 = vmatpush2.msra.mxu0 0.0
        %792 = vmatprep.subr.mxu0 0.0
        %793 = vmatpush2.msra.mxu0 0.0
        %794 = vmatprep.subr.mxu0 0.0
        %795 = vmatpush2.msra.mxu0 0.0
        %796 = vmatprep.subr.mxu0 0.0
        %797 = vmatpush2.msra.mxu0 0.0
        %798 = vmatprep.mubr.f32.mxu0 0.0
        %799 = vmatmul.mubr.f32.gmra.mxu0 %v732
        %v800 = vpop.f32.mrf.mxu0
        %v801 = vadd.f32 0.0, %v800
        %v802 = vpop.f32.mrf.mxu0
        %803 = vdwg.mxu0
        %v804 = vadd.f32 %v731, %v801
        %v805 = vxor.u32 %v804, 2147483648
        %v806 = vmul.f32 %v805, 1.442695
        %v807 = vpow.pop %v806
        %v808 = vadd.f32 %v807, 1.0
        %v809 = vrcp.pop %v808
        %v810 = vmul.f32 1.0, %v809
        %v811 = vtanh.pop %v804
        %v812 = vmul.f32 %v810, %v718
        %814 = vrot.lane.b32.xlu0 %v811, 64
        %v815 = vpop.permute.xlu0 %814
        %v817 = vmul.f32 %v810, %v815
        %819 = vrot.lane.b32.xlu0 %v817, 32
        %v820 = vpop.permute.xlu0 %819
        %v822 = vadd.f32 %v812, %v820
        %v823 = vtanh.pop %v822
        %825 = vrot.lane.b32.xlu0 %v823, 64
        %v826 = vpop.permute.xlu0 %825
        %v828 = vmul.f32 %v810, %v826
        %830 = vrot.lane.b32.xlu0 %v828, 32
        %v831 = vpop.permute.xlu0 %830
        %833 = vst.msk [vmem:[#allocation2 + $0x2] sm:$0x3] %vm729, %v831
        %v834 = vld [vmem:[#allocation3 + $0x4] sm:$0x3]
        %v835 = vsel %vm622, %v831, 0
        %837 = vmatprep.subr.mxu0 0.0
        %838 = vmatpush1.msra.mxu0 0.0
        %839 = vmatprep.subr.mxu0 0.0
        %840 = vmatpush1.msra.mxu0 0.0
        %841 = vmatprep.subr.mxu0 0.0
        %842 = vmatpush1.msra.mxu0 0.0
        %843 = vmatprep.subr.mxu0 0.0
        %844 = vmatpush1.msra.mxu0 0.0
        %845 = vmatprep.subr.mxu0 0.0
        %846 = vmatpush1.msra.mxu0 0.0
        %847 = vmatprep.subr.mxu0 0.0
        %848 = vmatpush1.msra.mxu0 0.0
        %849 = vmatprep.subr.mxu0 0.0
        %850 = vmatpush1.msra.mxu0 0.0
        %851 = vmatprep.subr.mxu0 0.0
        %852 = vmatpush1.msra.mxu0 0.0
        %853 = vmatprep.subr.mxu0 0.0
        %854 = vmatpush1.msra.mxu0 0.0
        %855 = vmatprep.subr.mxu0 0.0
        %856 = vmatpush1.msra.mxu0 0.0
        %857 = vmatprep.subr.mxu0 0.0
        %858 = vmatpush1.msra.mxu0 0.0
        %859 = vmatprep.subr.mxu0 0.0
        %860 = vmatpush1.msra.mxu0 0.0
        %861 = vmatprep.subr.mxu0 0.0
        %862 = vmatpush1.msra.mxu0 %v618
        %863 = vmatprep.subr.mxu0 0.0
        %864 = vmatpush1.msra.mxu0 %v617
        %865 = vmatprep.subr.mxu0 0.0
        %866 = vmatpush1.msra.mxu0 %v616
        %867 = vmatprep.subr.mxu0 0.0
        %868 = vmatpush1.msra.mxu0 %v615
        %869 = vmatprep.subr.mxu0 0.0
        %870 = vmatpush2.msra.mxu0 0.0
        %871 = vmatprep.subr.mxu0 0.0
        %872 = vmatpush2.msra.mxu0 0.0
        %873 = vmatprep.subr.mxu0 0.0
        %874 = vmatpush2.msra.mxu0 0.0
        %875 = vmatprep.subr.mxu0 0.0
        %876 = vmatpush2.msra.mxu0 0.0
        %877 = vmatprep.subr.mxu0 0.0
        %878 = vmatpush2.msra.mxu0 0.0
        %879 = vmatprep.subr.mxu0 0.0
        %880 = vmatpush2.msra.mxu0 0.0
        %881 = vmatprep.subr.mxu0 0.0
        %882 = vmatpush2.msra.mxu0 0.0
        %883 = vmatprep.subr.mxu0 0.0
        %884 = vmatpush2.msra.mxu0 0.0
        %885 = vmatprep.subr.mxu0 0.0
        %886 = vmatpush2.msra.mxu0 0.0
        %887 = vmatprep.subr.mxu0 0.0
        %888 = vmatpush2.msra.mxu0 0.0
        %889 = vmatprep.subr.mxu0 0.0
        %890 = vmatpush2.msra.mxu0 0.0
        %891 = vmatprep.subr.mxu0 0.0
        %892 = vmatpush2.msra.mxu0 0.0
        %893 = vmatprep.subr.mxu0 0.0
        %894 = vmatpush2.msra.mxu0 0.0
        %895 = vmatprep.subr.mxu0 0.0
        %896 = vmatpush2.msra.mxu0 0.0
        %897 = vmatprep.subr.mxu0 0.0
        %898 = vmatpush2.msra.mxu0 0.0
        %899 = vmatprep.subr.mxu0 0.0
        %900 = vmatpush2.msra.mxu0 0.0
        %901 = vmatprep.mubr.f32.mxu0 0.0
        %902 = vmatmul.mubr.f32.gmra.mxu0 %v835
        %v903 = vpop.f32.mrf.mxu0
        %v904 = vadd.f32 0.0, %v903
        %v905 = vpop.f32.mrf.mxu0
        %906 = vdwg.mxu0
        %v907 = vadd.f32 %v834, %v904
        %v908 = vxor.u32 %v907, 2147483648
        %v909 = vmul.f32 %v908, 1.442695
        %v910 = vpow.pop %v909
        %v911 = vadd.f32 %v910, 1.0
        %v912 = vrcp.pop %v911
        %v913 = vmul.f32 1.0, %v912
        %v914 = vtanh.pop %v907
        %v915 = vmul.f32 %v913, %v822
        %917 = vrot.lane.b32.xlu0 %v914, 64
        %v918 = vpop.permute.xlu0 %917
        %v920 = vmul.f32 %v913, %v918
        %922 = vrot.lane.b32.xlu0 %v920, 32
        %v923 = vpop.permute.xlu0 %922
        %v925 = vadd.f32 %v915, %v923
        %v926 = vtanh.pop %v925
        %928 = vrot.lane.b32.xlu0 %v926, 64
        %v929 = vpop.permute.xlu0 %928
        %v931 = vmul.f32 %v913, %v929
        %933 = vrot.lane.b32.xlu0 %v931, 32
        %v934 = vpop.permute.xlu0 %933
        %936 = vst.msk [vmem:[#allocation2 + $0x4] sm:$0x3] %vm729, %v934
        %v937 = vld [vmem:[#allocation3 + $0x6] sm:$0x3]
        %v938 = vsel %vm622, %v934, 0
        %940 = vmatprep.subr.mxu0 0.0
        %941 = vmatpush1.msra.mxu0 0.0
        %942 = vmatprep.subr.mxu0 0.0
        %943 = vmatpush1.msra.mxu0 0.0
        %944 = vmatprep.subr.mxu0 0.0
        %945 = vmatpush1.msra.mxu0 0.0
        %946 = vmatprep.subr.mxu0 0.0
        %947 = vmatpush1.msra.mxu0 0.0
        %948 = vmatprep.subr.mxu0 0.0
        %949 = vmatpush1.msra.mxu0 0.0
        %950 = vmatprep.subr.mxu0 0.0
        %951 = vmatpush1.msra.mxu0 0.0
        %952 = vmatprep.subr.mxu0 0.0
        %953 = vmatpush1.msra.mxu0 0.0
        %954 = vmatprep.subr.mxu0 0.0
        %955 = vmatpush1.msra.mxu0 0.0
        %956 = vmatprep.subr.mxu0 0.0
        %957 = vmatpush1.msra.mxu0 0.0
        %958 = vmatprep.subr.mxu0 0.0
        %959 = vmatpush1.msra.mxu0 0.0
        %960 = vmatprep.subr.mxu0 0.0
        %961 = vmatpush1.msra.mxu0 0.0
        %962 = vmatprep.subr.mxu0 0.0
        %963 = vmatpush1.msra.mxu0 0.0
        %964 = vmatprep.subr.mxu0 0.0
        %965 = vmatpush1.msra.mxu0 %v618
        %966 = vmatprep.subr.mxu0 0.0
        %967 = vmatpush1.msra.mxu0 %v617
        %968 = vmatprep.subr.mxu0 0.0
        %969 = vmatpush1.msra.mxu0 %v616
        %970 = vmatprep.subr.mxu0 0.0
        %971 = vmatpush1.msra.mxu0 %v615
        %972 = vmatprep.subr.mxu0 0.0
        %973 = vmatpush2.msra.mxu0 0.0
        %974 = vmatprep.subr.mxu0 0.0
        %975 = vmatpush2.msra.mxu0 0.0
        %976 = vmatprep.subr.mxu0 0.0
        %977 = vmatpush2.msra.mxu0 0.0
        %978 = vmatprep.subr.mxu0 0.0
        %979 = vmatpush2.msra.mxu0 0.0
        %980 = vmatprep.subr.mxu0 0.0
        %981 = vmatpush2.msra.mxu0 0.0
        %982 = vmatprep.subr.mxu0 0.0
        %983 = vmatpush2.msra.mxu0 0.0
        %984 = vmatprep.subr.mxu0 0.0
        %985 = vmatpush2.msra.mxu0 0.0
        %986 = vmatprep.subr.mxu0 0.0
        %987 = vmatpush2.msra.mxu0 0.0
        %988 = vmatprep.subr.mxu0 0.0
        %989 = vmatpush2.msra.mxu0 0.0
        %990 = vmatprep.subr.mxu0 0.0
        %991 = vmatpush2.msra.mxu0 0.0
        %992 = vmatprep.subr.mxu0 0.0
        %993 = vmatpush2.msra.mxu0 0.0
        %994 = vmatprep.subr.mxu0 0.0
        %995 = vmatpush2.msra.mxu0 0.0
        %996 = vmatprep.subr.mxu0 0.0
        %997 = vmatpush2.msra.mxu0 0.0
        %998 = vmatprep.subr.mxu0 0.0
        %999 = vmatpush2.msra.mxu0 0.0
        %1000 = vmatprep.subr.mxu0 0.0
        %1001 = vmatpush2.msra.mxu0 0.0
        %1002 = vmatprep.subr.mxu0 0.0
        %1003 = vmatpush2.msra.mxu0 0.0
        %1004 = vmatprep.mubr.f32.mxu0 0.0
        %1005 = vmatmul.mubr.f32.gmra.mxu0 %v938
        %v1006 = vpop.f32.mrf.mxu0
        %v1007 = vadd.f32 0.0, %v1006
        %v1008 = vpop.f32.mrf.mxu0
        %1009 = vdwg.mxu0
        %v1010 = vadd.f32 %v937, %v1007
        %v1011 = vxor.u32 %v1010, 2147483648
        %v1012 = vmul.f32 %v1011, 1.442695
        %v1013 = vpow.pop %v1012
        %v1014 = vadd.f32 %v1013, 1.0
        %v1015 = vrcp.pop %v1014
        %v1016 = vmul.f32 1.0, %v1015
        %v1017 = vtanh.pop %v1010
        %v1018 = vmul.f32 %v1016, %v925
        %1020 = vrot.lane.b32.xlu0 %v1017, 64
        %v1021 = vpop.permute.xlu0 %1020
        %v1023 = vmul.f32 %v1016, %v1021
        %1025 = vrot.lane.b32.xlu0 %v1023, 32
        %v1026 = vpop.permute.xlu0 %1025
        %v1028 = vadd.f32 %v1018, %v1026
        %v1029 = vtanh.pop %v1028
        %1031 = vrot.lane.b32.xlu0 %v1029, 64
        %v1032 = vpop.permute.xlu0 %1031
        %v1034 = vmul.f32 %v1016, %v1032
        %1036 = vrot.lane.b32.xlu0 %v1034, 32
        %v1037 = vpop.permute.xlu0 %1036
        %1039 = vst.msk [vmem:[#allocation2 + $0x6] sm:$0x3] %vm729, %v1037
        %v1040 = vld [vmem:[#allocation3 + $0x8] sm:$0x3]
        %v1041 = vsel %vm622, %v1037, 0
        %1043 = vmatprep.subr.mxu0 0.0
        %1044 = vmatpush1.msra.mxu0 0.0
        %1045 = vmatprep.subr.mxu0 0.0
        %1046 = vmatpush1.msra.mxu0 0.0
        %1047 = vmatprep.subr.mxu0 0.0
        %1048 = vmatpush1.msra.mxu0 0.0
        %1049 = vmatprep.subr.mxu0 0.0
        %1050 = vmatpush1.msra.mxu0 0.0
        %1051 = vmatprep.subr.mxu0 0.0
        %1052 = vmatpush1.msra.mxu0 0.0
        %1053 = vmatprep.subr.mxu0 0.0
        %1054 = vmatpush1.msra.mxu0 0.0
        %1055 = vmatprep.subr.mxu0 0.0
        %1056 = vmatpush1.msra.mxu0 0.0
        %1057 = vmatprep.subr.mxu0 0.0
        %1058 = vmatpush1.msra.mxu0 0.0
        %1059 = vmatprep.subr.mxu0 0.0
        %1060 = vmatpush1.msra.mxu0 0.0
        %1061 = vmatprep.subr.mxu0 0.0
        %1062 = vmatpush1.msra.mxu0 0.0
        %1063 = vmatprep.subr.mxu0 0.0
        %1064 = vmatpush1.msra.mxu0 0.0
        %1065 = vmatprep.subr.mxu0 0.0
        %1066 = vmatpush1.msra.mxu0 0.0
        %1067 = vmatprep.subr.mxu0 0.0
        %1068 = vmatpush1.msra.mxu0 %v618
        %1069 = vmatprep.subr.mxu0 0.0
        %1070 = vmatpush1.msra.mxu0 %v617
        %1071 = vmatprep.subr.mxu0 0.0
        %1072 = vmatpush1.msra.mxu0 %v616
        %1073 = vmatprep.subr.mxu0 0.0
        %1074 = vmatpush1.msra.mxu0 %v615
        %1075 = vmatprep.subr.mxu0 0.0
        %1076 = vmatpush2.msra.mxu0 0.0
        %1077 = vmatprep.subr.mxu0 0.0
        %1078 = vmatpush2.msra.mxu0 0.0
        %1079 = vmatprep.subr.mxu0 0.0
        %1080 = vmatpush2.msra.mxu0 0.0
        %1081 = vmatprep.subr.mxu0 0.0
        %1082 = vmatpush2.msra.mxu0 0.0
        %1083 = vmatprep.subr.mxu0 0.0
        %1084 = vmatpush2.msra.mxu0 0.0
        %1085 = vmatprep.subr.mxu0 0.0
        %1086 = vmatpush2.msra.mxu0 0.0
        %1087 = vmatprep.subr.mxu0 0.0
        %1088 = vmatpush2.msra.mxu0 0.0
        %1089 = vmatprep.subr.mxu0 0.0
        %1090 = vmatpush2.msra.mxu0 0.0
        %1091 = vmatprep.subr.mxu0 0.0
        %1092 = vmatpush2.msra.mxu0 0.0
        %1093 = vmatprep.subr.mxu0 0.0
        %1094 = vmatpush2.msra.mxu0 0.0
        %1095 = vmatprep.subr.mxu0 0.0
        %1096 = vmatpush2.msra.mxu0 0.0
        %1097 = vmatprep.subr.mxu0 0.0
        %1098 = vmatpush2.msra.mxu0 0.0
        %1099 = vmatprep.subr.mxu0 0.0
        %1100 = vmatpush2.msra.mxu0 0.0
        %1101 = vmatprep.subr.mxu0 0.0
        %1102 = vmatpush2.msra.mxu0 0.0
        %1103 = vmatprep.subr.mxu0 0.0
        %1104 = vmatpush2.msra.mxu0 0.0
        %1105 = vmatprep.subr.mxu0 0.0
        %1106 = vmatpush2.msra.mxu0 0.0
        %1107 = vmatprep.mubr.f32.mxu0 0.0
        %1108 = vmatmul.mubr.f32.gmra.mxu0 %v1041
        %v1109 = vpop.f32.mrf.mxu0
        %v1110 = vadd.f32 0.0, %v1109
        %v1111 = vpop.f32.mrf.mxu0
        %1112 = vdwg.mxu0
        %v1113 = vadd.f32 %v1040, %v1110
        %v1114 = vxor.u32 %v1113, 2147483648
        %v1115 = vmul.f32 %v1114, 1.442695
        %v1116 = vpow.pop %v1115
        %v1117 = vadd.f32 %v1116, 1.0
        %v1118 = vrcp.pop %v1117
        %v1119 = vmul.f32 1.0, %v1118
        %v1120 = vtanh.pop %v1113
        %v1121 = vmul.f32 %v1119, %v1028
        %1123 = vrot.lane.b32.xlu0 %v1120, 64
        %v1124 = vpop.permute.xlu0 %1123
        %v1126 = vmul.f32 %v1119, %v1124
        %1128 = vrot.lane.b32.xlu0 %v1126, 32
        %v1129 = vpop.permute.xlu0 %1128
        %v1131 = vadd.f32 %v1121, %v1129
        %v1132 = vtanh.pop %v1131
        %1134 = vrot.lane.b32.xlu0 %v1132, 64
        %v1135 = vpop.permute.xlu0 %1134
        %v1137 = vmul.f32 %v1119, %v1135
        %1139 = vrot.lane.b32.xlu0 %v1137, 32
        %v1140 = vpop.permute.xlu0 %1139
        %1142 = vst.msk [vmem:[#allocation2 + $0x8] sm:$0x3] %vm729, %v1140
        %v1143 = vld [vmem:[#allocation3 + $0xa] sm:$0x3]
        %v1144 = vsel %vm622, %v1140, 0
        %1146 = vmatprep.subr.mxu0 0.0
        %1147 = vmatpush1.msra.mxu0 0.0
        %1148 = vmatprep.subr.mxu0 0.0
        %1149 = vmatpush1.msra.mxu0 0.0
        %1150 = vmatprep.subr.mxu0 0.0
        %1151 = vmatpush1.msra.mxu0 0.0
        %1152 = vmatprep.subr.mxu0 0.0
        %1153 = vmatpush1.msra.mxu0 0.0
        %1154 = vmatprep.subr.mxu0 0.0
        %1155 = vmatpush1.msra.mxu0 0.0
        %1156 = vmatprep.subr.mxu0 0.0
        %1157 = vmatpush1.msra.mxu0 0.0
        %1158 = vmatprep.subr.mxu0 0.0
        %1159 = vmatpush1.msra.mxu0 0.0
        %1160 = vmatprep.subr.mxu0 0.0
        %1161 = vmatpush1.msra.mxu0 0.0
        %1162 = vmatprep.subr.mxu0 0.0
        %1163 = vmatpush1.msra.mxu0 0.0
        %1164 = vmatprep.subr.mxu0 0.0
        %1165 = vmatpush1.msra.mxu0 0.0
        %1166 = vmatprep.subr.mxu0 0.0
        %1167 = vmatpush1.msra.mxu0 0.0
        %1168 = vmatprep.subr.mxu0 0.0
        %1169 = vmatpush1.msra.mxu0 0.0
        %1170 = vmatprep.subr.mxu0 0.0
        %1171 = vmatpush1.msra.mxu0 %v618
        %1172 = vmatprep.subr.mxu0 0.0
        %1173 = vmatpush1.msra.mxu0 %v617
        %1174 = vmatprep.subr.mxu0 0.0
        %1175 = vmatpush1.msra.mxu0 %v616
        %1176 = vmatprep.subr.mxu0 0.0
        %1177 = vmatpush1.msra.mxu0 %v615
        %1178 = vmatprep.subr.mxu0 0.0
        %1179 = vmatpush2.msra.mxu0 0.0
        %1180 = vmatprep.subr.mxu0 0.0
        %1181 = vmatpush2.msra.mxu0 0.0
        %1182 = vmatprep.subr.mxu0 0.0
        %1183 = vmatpush2.msra.mxu0 0.0
        %1184 = vmatprep.subr.mxu0 0.0
        %1185 = vmatpush2.msra.mxu0 0.0
        %1186 = vmatprep.subr.mxu0 0.0
        %1187 = vmatpush2.msra.mxu0 0.0
        %1188 = vmatprep.subr.mxu0 0.0
        %1189 = vmatpush2.msra.mxu0 0.0
        %1190 = vmatprep.subr.mxu0 0.0
        %1191 = vmatpush2.msra.mxu0 0.0
        %1192 = vmatprep.subr.mxu0 0.0
        %1193 = vmatpush2.msra.mxu0 0.0
        %1194 = vmatprep.subr.mxu0 0.0
        %1195 = vmatpush2.msra.mxu0 0.0
        %1196 = vmatprep.subr.mxu0 0.0
        %1197 = vmatpush2.msra.mxu0 0.0
        %1198 = vmatprep.subr.mxu0 0.0
        %1199 = vmatpush2.msra.mxu0 0.0
        %1200 = vmatprep.subr.mxu0 0.0
        %1201 = vmatpush2.msra.mxu0 0.0
        %1202 = vmatprep.subr.mxu0 0.0
        %1203 = vmatpush2.msra.mxu0 0.0
        %1204 = vmatprep.subr.mxu0 0.0
        %1205 = vmatpush2.msra.mxu0 0.0
        %1206 = vmatprep.subr.mxu0 0.0
        %1207 = vmatpush2.msra.mxu0 0.0
        %1208 = vmatprep.subr.mxu0 0.0
        %1209 = vmatpush2.msra.mxu0 0.0
        %1210 = vmatprep.mubr.f32.mxu0 0.0
        %1211 = vmatmul.mubr.f32.gmra.mxu0 %v1144
        %v1212 = vpop.f32.mrf.mxu0
        %v1213 = vadd.f32 0.0, %v1212
        %v1214 = vpop.f32.mrf.mxu0
        %1215 = vdwg.mxu0
        %v1216 = vadd.f32 %v1143, %v1213
        %v1217 = vxor.u32 %v1216, 2147483648
        %v1218 = vmul.f32 %v1217, 1.442695
        %v1219 = vpow.pop %v1218
        %v1220 = vadd.f32 %v1219, 1.0
        %v1221 = vrcp.pop %v1220
        %v1222 = vmul.f32 1.0, %v1221
        %v1223 = vtanh.pop %v1216
        %v1224 = vmul.f32 %v1222, %v1131
        %1226 = vrot.lane.b32.xlu0 %v1223, 64
        %v1227 = vpop.permute.xlu0 %1226
        %v1229 = vmul.f32 %v1222, %v1227
        %1231 = vrot.lane.b32.xlu0 %v1229, 32
        %v1232 = vpop.permute.xlu0 %1231
        %v1234 = vadd.f32 %v1224, %v1232
        %v1235 = vtanh.pop %v1234
        %1237 = vrot.lane.b32.xlu0 %v1235, 64
        %v1238 = vpop.permute.xlu0 %1237
        %v1240 = vmul.f32 %v1222, %v1238
        %1242 = vrot.lane.b32.xlu0 %v1240, 32
        %v1243 = vpop.permute.xlu0 %1242
        %1245 = vst.msk [vmem:[#allocation2 + $0xa] sm:$0x3] %vm729, %v1243
        %v1246 = vld [vmem:[#allocation3 + $0xc] sm:$0x3]
        %v1247 = vsel %vm622, %v1243, 0
        %1249 = vmatprep.subr.mxu0 0.0
        %1250 = vmatpush1.msra.mxu0 0.0
        %1251 = vmatprep.subr.mxu0 0.0
        %1252 = vmatpush1.msra.mxu0 0.0
        %1253 = vmatprep.subr.mxu0 0.0
        %1254 = vmatpush1.msra.mxu0 0.0
        %1255 = vmatprep.subr.mxu0 0.0
        %1256 = vmatpush1.msra.mxu0 0.0
        %1257 = vmatprep.subr.mxu0 0.0
        %1258 = vmatpush1.msra.mxu0 0.0
        %1259 = vmatprep.subr.mxu0 0.0
        %1260 = vmatpush1.msra.mxu0 0.0
        %1261 = vmatprep.subr.mxu0 0.0
        %1262 = vmatpush1.msra.mxu0 0.0
        %1263 = vmatprep.subr.mxu0 0.0
        %1264 = vmatpush1.msra.mxu0 0.0
        %1265 = vmatprep.subr.mxu0 0.0
        %1266 = vmatpush1.msra.mxu0 0.0
        %1267 = vmatprep.subr.mxu0 0.0
        %1268 = vmatpush1.msra.mxu0 0.0
        %1269 = vmatprep.subr.mxu0 0.0
        %1270 = vmatpush1.msra.mxu0 0.0
        %1271 = vmatprep.subr.mxu0 0.0
        %1272 = vmatpush1.msra.mxu0 0.0
        %1273 = vmatprep.subr.mxu0 0.0
        %1274 = vmatpush1.msra.mxu0 %v618
        %1275 = vmatprep.subr.mxu0 0.0
        %1276 = vmatpush1.msra.mxu0 %v617
        %1277 = vmatprep.subr.mxu0 0.0
        %1278 = vmatpush1.msra.mxu0 %v616
        %1279 = vmatprep.subr.mxu0 0.0
        %1280 = vmatpush1.msra.mxu0 %v615
        %1281 = vmatprep.subr.mxu0 0.0
        %1282 = vmatpush2.msra.mxu0 0.0
        %1283 = vmatprep.subr.mxu0 0.0
        %1284 = vmatpush2.msra.mxu0 0.0
        %1285 = vmatprep.subr.mxu0 0.0
        %1286 = vmatpush2.msra.mxu0 0.0
        %1287 = vmatprep.subr.mxu0 0.0
        %1288 = vmatpush2.msra.mxu0 0.0
        %1289 = vmatprep.subr.mxu0 0.0
        %1290 = vmatpush2.msra.mxu0 0.0
        %1291 = vmatprep.subr.mxu0 0.0
        %1292 = vmatpush2.msra.mxu0 0.0
        %1293 = vmatprep.subr.mxu0 0.0
        %1294 = vmatpush2.msra.mxu0 0.0
        %1295 = vmatprep.subr.mxu0 0.0
        %1296 = vmatpush2.msra.mxu0 0.0
        %1297 = vmatprep.subr.mxu0 0.0
        %1298 = vmatpush2.msra.mxu0 0.0
        %1299 = vmatprep.subr.mxu0 0.0
        %1300 = vmatpush2.msra.mxu0 0.0
        %1301 = vmatprep.subr.mxu0 0.0
        %1302 = vmatpush2.msra.mxu0 0.0
        %1303 = vmatprep.subr.mxu0 0.0
        %1304 = vmatpush2.msra.mxu0 0.0
        %1305 = vmatprep.subr.mxu0 0.0
        %1306 = vmatpush2.msra.mxu0 0.0
        %1307 = vmatprep.subr.mxu0 0.0
        %1308 = vmatpush2.msra.mxu0 0.0
        %1309 = vmatprep.subr.mxu0 0.0
        %1310 = vmatpush2.msra.mxu0 0.0
        %1311 = vmatprep.subr.mxu0 0.0
        %1312 = vmatpush2.msra.mxu0 0.0
        %1313 = vmatprep.mubr.f32.mxu0 0.0
        %1314 = vmatmul.mubr.f32.gmra.mxu0 %v1247
        %v1315 = vpop.f32.mrf.mxu0
        %v1316 = vadd.f32 0.0, %v1315
        %v1317 = vpop.f32.mrf.mxu0
        %1318 = vdwg.mxu0
        %v1319 = vadd.f32 %v1246, %v1316
        %v1320 = vxor.u32 %v1319, 2147483648
        %v1321 = vmul.f32 %v1320, 1.442695
        %v1322 = vpow.pop %v1321
        %v1323 = vadd.f32 %v1322, 1.0
        %v1324 = vrcp.pop %v1323
        %v1325 = vmul.f32 1.0, %v1324
        %v1326 = vtanh.pop %v1319
        %v1327 = vmul.f32 %v1325, %v1234
        %1329 = vrot.lane.b32.xlu0 %v1326, 64
        %v1330 = vpop.permute.xlu0 %1329
        %v1332 = vmul.f32 %v1325, %v1330
        %1334 = vrot.lane.b32.xlu0 %v1332, 32
        %v1335 = vpop.permute.xlu0 %1334
        %v1337 = vadd.f32 %v1327, %v1335
        %v1338 = vtanh.pop %v1337
        %1340 = vrot.lane.b32.xlu0 %v1338, 64
        %v1341 = vpop.permute.xlu0 %1340
        %v1343 = vmul.f32 %v1325, %v1341
        %1345 = vrot.lane.b32.xlu0 %v1343, 32
        %v1346 = vpop.permute.xlu0 %1345
        %1348 = vst.msk [vmem:[#allocation2 + $0xc] sm:$0x3] %vm729, %v1346
        %v1349 = vld [vmem:[#allocation3 + $0xe] sm:$0x3]
        %v1350 = vsel %vm622, %v1346, 0
        %1352 = vmatprep.subr.mxu0 0.0
        %1353 = vmatpush1.msra.mxu0 0.0
        %1354 = vmatprep.subr.mxu0 0.0
        %1355 = vmatpush1.msra.mxu0 0.0
        %1356 = vmatprep.subr.mxu0 0.0
        %1357 = vmatpush1.msra.mxu0 0.0
        %1358 = vmatprep.subr.mxu0 0.0
        %1359 = vmatpush1.msra.mxu0 0.0
        %1360 = vmatprep.subr.mxu0 0.0
        %1361 = vmatpush1.msra.mxu0 0.0
        %1362 = vmatprep.subr.mxu0 0.0
        %1363 = vmatpush1.msra.mxu0 0.0
        %1364 = vmatprep.subr.mxu0 0.0
        %1365 = vmatpush1.msra.mxu0 0.0
        %1366 = vmatprep.subr.mxu0 0.0
        %1367 = vmatpush1.msra.mxu0 0.0
        %1368 = vmatprep.subr.mxu0 0.0
        %1369 = vmatpush1.msra.mxu0 0.0
        %1370 = vmatprep.subr.mxu0 0.0
        %1371 = vmatpush1.msra.mxu0 0.0
        %1372 = vmatprep.subr.mxu0 0.0
        %1373 = vmatpush1.msra.mxu0 0.0
        %1374 = vmatprep.subr.mxu0 0.0
        %1375 = vmatpush1.msra.mxu0 0.0
        %1376 = vmatprep.subr.mxu0 0.0
        %1377 = vmatpush1.msra.mxu0 %v618
        %1378 = vmatprep.subr.mxu0 0.0
        %1379 = vmatpush1.msra.mxu0 %v617
        %1380 = vmatprep.subr.mxu0 0.0
        %1381 = vmatpush1.msra.mxu0 %v616
        %1382 = vmatprep.subr.mxu0 0.0
        %1383 = vmatpush1.msra.mxu0 %v615
        %1384 = vmatprep.subr.mxu0 0.0
        %1385 = vmatpush2.msra.mxu0 0.0
        %1386 = vmatprep.subr.mxu0 0.0
        %1387 = vmatpush2.msra.mxu0 0.0
        %1388 = vmatprep.subr.mxu0 0.0
        %1389 = vmatpush2.msra.mxu0 0.0
        %1390 = vmatprep.subr.mxu0 0.0
        %1391 = vmatpush2.msra.mxu0 0.0
        %1392 = vmatprep.subr.mxu0 0.0
        %1393 = vmatpush2.msra.mxu0 0.0
        %1394 = vmatprep.subr.mxu0 0.0
        %1395 = vmatpush2.msra.mxu0 0.0
        %1396 = vmatprep.subr.mxu0 0.0
        %1397 = vmatpush2.msra.mxu0 0.0
        %1398 = vmatprep.subr.mxu0 0.0
        %1399 = vmatpush2.msra.mxu0 0.0
        %1400 = vmatprep.subr.mxu0 0.0
        %1401 = vmatpush2.msra.mxu0 0.0
        %1402 = vmatprep.subr.mxu0 0.0
        %1403 = vmatpush2.msra.mxu0 0.0
        %1404 = vmatprep.subr.mxu0 0.0
        %1405 = vmatpush2.msra.mxu0 0.0
        %1406 = vmatprep.subr.mxu0 0.0
        %1407 = vmatpush2.msra.mxu0 0.0
        %1408 = vmatprep.subr.mxu0 0.0
        %1409 = vmatpush2.msra.mxu0 0.0
        %1410 = vmatprep.subr.mxu0 0.0
        %1411 = vmatpush2.msra.mxu0 0.0
        %1412 = vmatprep.subr.mxu0 0.0
        %1413 = vmatpush2.msra.mxu0 0.0
        %1414 = vmatprep.subr.mxu0 0.0
        %1415 = vmatpush2.msra.mxu0 0.0
        %1416 = vmatprep.mubr.f32.mxu0 0.0
        %1417 = vmatmul.mubr.f32.gmra.mxu0 %v1350
        %v1418 = vpop.f32.mrf.mxu0
        %v1419 = vadd.f32 0.0, %v1418
        %v1420 = vpop.f32.mrf.mxu0
        %1421 = vdwg.mxu0
        %v1422 = vadd.f32 %v1349, %v1419
        %v1423 = vxor.u32 %v1422, 2147483648
        %v1424 = vmul.f32 %v1423, 1.442695
        %v1425 = vpow.pop %v1424
        %v1426 = vadd.f32 %v1425, 1.0
        %v1427 = vrcp.pop %v1426
        %v1428 = vmul.f32 1.0, %v1427
        %v1429 = vtanh.pop %v1422
        %v1430 = vmul.f32 %v1428, %v1337
        %1432 = vrot.lane.b32.xlu0 %v1429, 64
        %v1433 = vpop.permute.xlu0 %1432
        %v1435 = vmul.f32 %v1428, %v1433
        %1437 = vrot.lane.b32.xlu0 %v1435, 32
        %v1438 = vpop.permute.xlu0 %1437
        %v1440 = vadd.f32 %v1430, %v1438
        %v1441 = vtanh.pop %v1440
        %1443 = vrot.lane.b32.xlu0 %v1441, 64
        %v1444 = vpop.permute.xlu0 %1443
        %v1446 = vmul.f32 %v1428, %v1444
        %1448 = vrot.lane.b32.xlu0 %v1446, 32
        %v1449 = vpop.permute.xlu0 %1448
        %1451 = vst.msk [vmem:[#allocation2 + $0xe] sm:$0x3] %vm729, %v1449
        %1452 = vst.msk [vmem:[%s490] sm:$0x3] %vm729, %v1449
        %1454 = vrot.lane.b32.xlu0 %v1440, 96
        %v1455 = vpop.permute.xlu0 %1454
        %1457 = vst.msk [vmem:[%s497] sm:$0x3] %vm729, %v1455
        %p1458 = scmp.eq.s32.totalorder %s35, 1
        // Predicated region
        $region77: #{tpu_custom_call.1} parent=51 // pred_check
          %p1459 = pneg %p1458
        $region78: #{tpu_custom_call.1} parent=51 // pred_check_branch
          %1461 = sbr.rel (%p1459) target = $region80
        $region79: #{tpu_custom_call.1} parent=51 // pred_region
          %v1462 = vld [vmem:[#allocation2] sm:$0xff]
          %v1463 = vld [vmem:[#allocation2 + $0x8] sm:$0xff]
          %v1464 = vmax.f32 %v1462, 0.0
          %v1465 = vmax.f32 %v1463, 0.0
          %v1466 = vld [vmem:[%s6] sm:$0x1]
          %v1467 = vld [vmem:[#allocation4] sm:$0x1]
          %1469 = vset.pattern.permute.xlu0 0
          %1470 = vperm.xlu0 %1469, %v1467
          %v1471 = vpop.permute.xlu0 %1470
          %v1473 = vlaneseq
          %v1474 = vshrl.u32 %v1473, 7
          %v1475 = vsub.s32 0, %v1474
          %v1476 = vrot.slane %v1471, %v1475
          %v1478 = vsel %vm622, %v1466, 0
          %v1481 = vsel %vm622, %v1464, 0
          %v1484 = vsel %vm622, %v1465, 0
          %1486 = vmatprep.subr.mxu0 0.0
          %1487 = vmatpush1.xpose.msra.mxu0 0.0
          %1488 = vmatprep.subr.mxu0 0.0
          %1489 = vmatpush1.xpose.msra.mxu0 0.0
          %1490 = vmatprep.subr.mxu0 0.0
          %1491 = vmatpush1.xpose.msra.mxu0 0.0
          %1492 = vmatprep.subr.mxu0 0.0
          %1493 = vmatpush1.xpose.msra.mxu0 0.0
          %1494 = vmatprep.subr.mxu0 0.0
          %1495 = vmatpush1.xpose.msra.mxu0 0.0
          %1496 = vmatprep.subr.mxu0 0.0
          %1497 = vmatpush1.xpose.msra.mxu0 0.0
          %1498 = vmatprep.subr.mxu0 0.0
          %1499 = vmatpush1.xpose.msra.mxu0 0.0
          %1500 = vmatprep.subr.mxu0 0.0
          %1501 = vmatpush1.xpose.msra.mxu0 0.0
          %1502 = vmatprep.subr.mxu0 0.0
          %1503 = vmatpush1.xpose.msra.mxu0 0.0
          %1504 = vmatprep.subr.mxu0 0.0
          %1505 = vmatpush1.xpose.msra.mxu0 0.0
          %1506 = vmatprep.subr.mxu0 0.0
          %1507 = vmatpush1.xpose.msra.mxu0 0.0
          %1508 = vmatprep.subr.mxu0 0.0
          %1509 = vmatpush1.xpose.msra.mxu0 0.0
          %1510 = vmatprep.subr.mxu0 0.0
          %1511 = vmatpush1.xpose.msra.mxu0 0.0
          %1512 = vmatprep.subr.mxu0 0.0
          %1513 = vmatpush1.xpose.msra.mxu0 0.0
          %1514 = vmatprep.subr.mxu0 0.0
          %1515 = vmatpush1.xpose.msra.mxu0 %v1484
          %1516 = vmatprep.subr.mxu0 0.0
          %1517 = vmatpush1.xpose.msra.mxu0 %v1481
          %1518 = vmatprep.subr.mxu0 0.0
          %1519 = vmatpush2.xpose.msra.mxu0 0.0
          %1520 = vmatprep.subr.mxu0 0.0
          %1521 = vmatpush2.xpose.msra.mxu0 0.0
          %1522 = vmatprep.subr.mxu0 0.0
          %1523 = vmatpush2.xpose.msra.mxu0 0.0
          %1524 = vmatprep.subr.mxu0 0.0
          %1525 = vmatpush2.xpose.msra.mxu0 0.0
          %1526 = vmatprep.subr.mxu0 0.0
          %1527 = vmatpush2.xpose.msra.mxu0 0.0
          %1528 = vmatprep.subr.mxu0 0.0
          %1529 = vmatpush2.xpose.msra.mxu0 0.0
          %1530 = vmatprep.subr.mxu0 0.0
          %1531 = vmatpush2.xpose.msra.mxu0 0.0
          %1532 = vmatprep.subr.mxu0 0.0
          %1533 = vmatpush2.xpose.msra.mxu0 0.0
          %1534 = vmatprep.subr.mxu0 0.0
          %1535 = vmatpush2.xpose.msra.mxu0 0.0
          %1536 = vmatprep.subr.mxu0 0.0
          %1537 = vmatpush2.xpose.msra.mxu0 0.0
          %1538 = vmatprep.subr.mxu0 0.0
          %1539 = vmatpush2.xpose.msra.mxu0 0.0
          %1540 = vmatprep.subr.mxu0 0.0
          %1541 = vmatpush2.xpose.msra.mxu0 0.0
          %1542 = vmatprep.subr.mxu0 0.0
          %1543 = vmatpush2.xpose.msra.mxu0 0.0
          %1544 = vmatprep.subr.mxu0 0.0
          %1545 = vmatpush2.xpose.msra.mxu0 0.0
          %1546 = vmatprep.subr.mxu0 0.0
          %1547 = vmatpush2.xpose.msra.mxu0 0.0
          %1548 = vmatprep.subr.mxu0 0.0
          %1549 = vmatpush2.xpose.msra.mxu0 0.0
          %1550 = vmatprep.mubr.f32.mxu0 0.0
          %1551 = vmatmul.mubr.f32.gmra.mxu0 %v1478
          %v1552 = vpop.f32.mrf.mxu0
          %v1553 = vadd.f32 %v1476, %v1552
          %v1554 = vpop.f32.mrf.mxu0
          %1555 = vdwg.mxu0
          %vm1556 = vcmask 122880
          %1557 = vst.msk [vmem:[#allocation13] sm:$0x1] %vm1556, %v1553
        $region80: #{tpu_custom_call.1} parent=51 // pred_fallthru
          _
        %s1558 = sand.u32 %s35, 1
        %s1559 = scalar_lea.sflag [#allocation15], %s1558
        %s1560 = sand.u32 %s257, 1
        %s1561 = smul.addr %s1560, 2
        %s1562 = scalar_lea.vmem [#allocation14], %s1561
        %s1563 = sand.u32 %s35, 1
        %s1564 = scalar_lea.sflag [#allocation15], %s1563
        %s1565 = sand.u32 %s283, 1
        %s1566 = smul.addr %s1565, 2
        %s1567 = scalar_lea.vmem [#allocation16], %s1566
        // Predicated region
        $region81: #{tpu_custom_call.1} parent=51 // pred_check
          %p1568 = pneg %p241
        $region82: #{tpu_custom_call.1} parent=51 // pred_check_branch
          %1570 = sbr.rel (%p1568) target = $region84
        $region83: #{tpu_custom_call.1} parent=51 // pred_region
          %s1572 = ssub.s32 16, 16
          %1573 = vsyncadd [#allocation7], %s1572
          %s1575 = sshll.u32 [#allocation13], 4
          %s1576 = int_to_ptr.vmem [resolvable:$true] %s1575
          %1578 = dma.vmem_to_hbm [thread:$0]  %s1576, 16, %s8, [#allocation7]
        $region84: #{tpu_custom_call.1} parent=51 // pred_fallthru
          _
        // Predicated region
        $region85: #{tpu_custom_call.1} parent=51 // pred_check
          %p1579 = pneg %p267
        $region86: #{tpu_custom_call.1} parent=51 // pred_check_branch
          %1581 = sbr.rel (%p1579) target = $region88
        $region87: #{tpu_custom_call.1} parent=51 // pred_region
          %s1583 = ssub.s32 32, 32
          %1584 = vsyncadd %s1559, %s1583
          %s1585 = smul.addr %s35, 32
          %s1586 = scalar_lea.hbm %s9, %s1585
          %s1588 = sshll.u32 %s1562, 4
          %s1589 = int_to_ptr.vmem [resolvable:$true] %s1588
          %1591 = dma.vmem_to_hbm [thread:$0]  %s1589, 32, %s1586, %s1559
        $region88: #{tpu_custom_call.1} parent=51 // pred_fallthru
          _
        // Predicated region
        $region89: #{tpu_custom_call.1} parent=51 // pred_check
          %p1592 = pneg %p293
        $region90: #{tpu_custom_call.1} parent=51 // pred_check_branch
          %1594 = sbr.rel (%p1592) target = $region92
        $region91: #{tpu_custom_call.1} parent=51 // pred_region
          %s1596 = ssub.s32 32, 32
          %1597 = vsyncadd %s1564, %s1596
          %s1598 = smul.addr %s35, 32
          %s1599 = scalar_lea.hbm %s10, %s1598
          %s1601 = sshll.u32 %s1567, 4
          %s1602 = int_to_ptr.vmem [resolvable:$true] %s1601
          %1604 = dma.vmem_to_hbm [thread:$0]  %s1602, 32, %s1599, %s1564
        $region92: #{tpu_custom_call.1} parent=51 // pred_fallthru
          _
        // Predicated region
        $region93: #{tpu_custom_call.1} parent=51 // pred_check
          %p1605 = pneg %p241
        $region94: #{tpu_custom_call.1} parent=51 // pred_check_branch
          %1607 = sbr.rel (%p1605) target = $region96
        $region95: #{tpu_custom_call.1} parent=51 // pred_region
          %1608 = dma.done [#allocation7], 16
        $region96: #{tpu_custom_call.1} parent=51 // pred_fallthru
          _
      $region52: #{tpu_custom_call.1} parent=5 // pred_fallthru
        _
      %p1609 = scmp.le.s32.totalorder 2, %s30
      // Predicated region
      $region97: #{tpu_custom_call.1} parent=5 // pred_check
        %p1610 = pneg %p1609
      $region98: #{tpu_custom_call.1} parent=5 // pred_check_branch
        %1612 = sbr.rel (%p1610) target = $region100
      $region99: #{tpu_custom_call.1} parent=5 // pred_region
        %s1613 = ssub.s32 %s30, 2
        // Predicated region
        $region101: #{tpu_custom_call.1} parent=99 // pred_check
          %p1614 = pneg %p273
        $region102: #{tpu_custom_call.1} parent=99 // pred_check_branch
          %1616 = sbr.rel (%p1614) target = $region104
        $region103: #{tpu_custom_call.1} parent=99 // pred_region
          %s1617 = sand.u32 %s36, 1
          %s1618 = scalar_lea.sflag [#allocation15], %s1617
          %s1619 = sand.u32 %s258, 1
          %s1620 = smul.addr %s1619, 2
          %s1621 = scalar_lea.vmem [#allocation14], %s1620
          %1622 = dma.done %s1618, 32
        $region104: #{tpu_custom_call.1} parent=99 // pred_fallthru
          _
        // Predicated region
        $region105: #{tpu_custom_call.1} parent=99 // pred_check
          %p1623 = pneg %p299
        $region106: #{tpu_custom_call.1} parent=99 // pred_check_branch
          %1625 = sbr.rel (%p1623) target = $region108
        $region107: #{tpu_custom_call.1} parent=99 // pred_region
          %s1626 = sand.u32 %s36, 1
          %s1627 = scalar_lea.sflag [#allocation15], %s1626
          %s1628 = sand.u32 %s284, 1
          %s1629 = smul.addr %s1628, 2
          %s1630 = scalar_lea.vmem [#allocation16], %s1629
          %1631 = dma.done %s1627, 32
        $region108: #{tpu_custom_call.1} parent=99 // pred_fallthru
          _
      $region100: #{tpu_custom_call.1} parent=5 // pred_fallthru
        _
    $region6: #{tpu_custom_call.1} parent=1 // loop_footer
      %s34 = sadd.s32 1, %s30
    $region7: #{tpu_custom_call.1} parent=1 // loop_footer_branch
      %29 = sbr.rel target = $region3
    $region8: #{tpu_custom_call.1} parent=1 // loop_exit
      _
    %1632 = vsyncpa [#allocation6], 1
    %s1633 = scalar_lea.sflag [#allocation6], 1
    %1634 = vsyncpa %s1633, 1
    %1635 = vsyncpa [#allocation9], 1
    %s1636 = scalar_lea.sflag [#allocation9], 1
    %1637 = vsyncpa %s1636, 1
    %1638 = vsyncpa [#allocation12], 1
    %s1639 = scalar_lea.sflag [#allocation12], 1
    %1640 = vsyncpa %s1639, 1
    %1641 = vsyncpa [#allocation7], 1
    %s1642 = scalar_lea.sflag [#allocation7], 1
    %1643 = vsyncpa %s1642, 1
    %1644 = vsyncpa [#allocation15], 1
    %s1645 = scalar_lea.sflag [#allocation15], 1
    %1646 = vsyncpa %s1645, 1

</llo_original>
